<compile_context>
chip_gen: v7x
topology: tpu7x:2x2x1
jax: 0.10.0
libtpu: 0.0.40
codegen_flags: <defaults>
</compile_context>

<pallas_src>
import functools

import jax
import jax.numpy as jnp
from jax import lax
from jax.experimental import pallas as pl
from jax.experimental.pallas import tpu as pltpu

_BN_EPS = 1e-5


def _mish_fast(x):
    # x * tanh(softplus(x)) with ONE transcendental + EUP reciprocal:
    #   tanh(log(1+e)) = e*(e+2) / (e*(e+2) + 2),  e = exp(x)
    # clamp keeps e^2 finite in f32; mish(x) == x to f32 precision for x >= 25.
    e = jnp.exp(jnp.minimum(x, 25.0))
    num = e * (e + 2.0)
    # divide -> EUP approximate reciprocal (frees the binding VPU slot)
    return x * num * pl.reciprocal(num + 2.0, approx=True)


def _mish_ref(x):
    # numerically stable reference formulation
    sp = jnp.maximum(x, 0.0) + jnp.log1p(jnp.exp(-jnp.abs(x)))
    return x * jnp.tanh(sp)


# --------------------------- fused Down kernel ---------------------------

def _down_fused_kernel(ho, wo, cin, cmid,
                       xr_ref, wb1_ref, b1_ref, wb2_ref, b2_ref, wb3_ref, b3_ref,
                       o_ref, pp_ref, ap_ref):
    # xr_ref : (1, 2, 2, Ho+1, (Wo+1)*Cin)  parity-split, -inf padded, lane-dense fused input
    #          element (0, rp, cp, rb, cb*Cin + c) == x_pad[2*rb+rp, 2*cb+cp, c]
    # wb*_ref: (3, (Wo+2)*Cin_l, Wo*Cout_l) banded conv weights, BN scale folded in
    # b*_ref : (1, Wo*Cout_l)               folded bias, tiled over the fused lane axis
    # o_ref  : (1, Ho, Wo*Cout)             lane-dense fused NHWC output block
    # pp_ref : (Ho+2, (Wo+2)*Cin)   VMEM scratch, zero-bordered pooled activation
    # ap_ref : (Ho+2, (Wo+2)*Cmid)  VMEM scratch, zero-bordered conv activation (reused)
    f32 = jnp.float32

    # ----- MaxPool2d(3, stride=2, padding=1): 9 unstrided shifted reads of the parity-split
    #       input; running max over lane-dense (Ho, Wo*Cin) tiles, all in registers -----
    pooled = None
    for dy in range(3):
        rp, ro = dy % 2, dy // 2
        for dx in range(3):
            cp, co = dx % 2, dx // 2
            tap = xr_ref[0, rp, cp, ro:ro + ho, co * cin: co * cin + wo * cin]
            pooled = tap if pooled is None else jnp.maximum(pooled, tap)

    # ----- zero ONLY the 1-pixel border of the padded scratch (interior fully overwritten).
    #       Done every step: scratch is per-core under "parallel" semantics, so a
    #       program_id==0 guard would be wrong. -----
    def zero_border(ref, c):
        ref[0:1, :] = jnp.zeros((1, (wo + 2) * c), f32)
        ref[ho + 1:ho + 2, :] = jnp.zeros((1, (wo + 2) * c), f32)
        ref[:, 0:c] = jnp.zeros((ho + 2, c), f32)
        ref[:, (wo + 1) * c:(wo + 2) * c] = jnp.zeros((ho + 2, c), f32)

    # ----- conv3x3(pad=1) + folded BN + Mish: 3 dy-banded MXU dots accumulated in f32.
    #       No im2col patch tensor; result lands directly in the fused (Ho, Wo*Cout) layout. -----
    def conv_bn_mish(src_ref, wb_ref, b_ref):
        acc = jnp.dot(src_ref[0:ho, :], wb_ref[0], preferred_element_type=f32)
        for dy in (1, 2):
            acc = acc + jnp.dot(src_ref[dy:dy + ho, :], wb_ref[dy],
                                preferred_element_type=f32)
        return _mish_fast(acc + b_ref[...])

    # layer 1: pooled -> zero-bordered scratch -> conv
    zero_border(pp_ref, cin)
    pp_ref[1:ho + 1, cin:(wo + 1) * cin] = pooled.astype(f32)
    y1 = conv_bn_mish(pp_ref, wb1_ref, b1_ref)            # (Ho, Wo*Cmid)

    # layer 2
    zero_border(ap_ref, cmid)
    ap_ref[1:ho + 1, cmid:(wo + 1) * cmid] = y1
    y2 = conv_bn_mish(ap_ref, wb2_ref, b2_ref)            # (Ho, Wo*Cmid)

    # layer 3 (reuse ap_ref; border is still zero)
    ap_ref[1:ho + 1, cmid:(wo + 1) * cmid] = y2
    y3 = conv_bn_mish(ap_ref, wb3_ref, b3_ref)            # (Ho, Wo*Cout)

    o_ref[0] = y3.astype(o_ref.dtype)                     # single lane-dense store


# ------------------------------ weight prep ------------------------------

def _fold_layer_banded(p, wo):
    """Fold conv bias + inference BatchNorm into the weights (BN scale folded into W), and
    build per dy in {0,1,2} a banded matrix B_dy of shape ((Wo+2)*Cin, Wo*Cout):
        B_dy[(ow+dx)*Cin + ci, ow*Cout + co] = w[co, ci, dy, dx] * scale[co]
    so that one MXU dot  act_padded[dy:dy+Ho, :] @ B_dy  performs all 3 dx taps for every
    output column at once and emits the lane-dense fused (Ho, Wo*Cout) layout directly."""
    co_n, ci_n = p["w"].shape[0], p["w"].shape[1]
    scale = p["gamma"] / jnp.sqrt(p["rvar"] + _BN_EPS)              # (Cout,)
    w_eff = p["w"] * scale[:, None, None, None]                     # scale folded into W
    bias = p["beta"] + (p["b"] - p["rmean"]) * scale                # (Cout,)

    wband = jnp.zeros((3, (wo + 2) * ci_n, wo * co_n), jnp.float32)
    for dy in range(3):
        # rows = dx*Cin + ci, cols = co
        blk = jnp.transpose(w_eff[:, :, dy, :], (2, 1, 0)).reshape(3 * ci_n, co_n)
        for ow in range(wo):  # trace-time one-off weight prep; tiny
            wband = wband.at[dy, ow * ci_n: ow * ci_n + 3 * ci_n,
                             ow * co_n:(ow + 1) * co_n].set(blk)
    bias_f = jnp.tile(bias, wo).reshape(1, wo * co_n)               # fused-lane bias
    return wband, bias_f


# ------------------------------ wrapper ------------------------------

def down_forward(x_nchw, params):
    n, cin, h, w = x_nchw.shape
    ho = (h - 1) // 2 + 1          # MaxPool2d(3, stride=2, padding=1) output size
    wo = (w - 1) // 2 + 1
    hb, wb = ho + 1, wo + 1
    cmid = params[0]["w"].shape[0]
    cout = params[-1]["w"].shape[0]

    # ONE wrapper prep expression: pad (-inf) + parity split + channels-last fuse.
    # XLA fuses this chain into a single relayout pass over the input.
    neg = jnp.finfo(x_nchw.dtype).min
    xp = jnp.pad(x_nchw, ((0, 0), (0, 0), (1, 2 * hb - h - 1), (1, 2 * wb - w - 1)),
                 constant_values=neg)                              # (N, C, 2hb, 2wb)
    xr = xp.reshape(n, cin, hb, 2, wb, 2)
    xr = jnp.transpose(xr, (0, 3, 5, 2, 4, 1))                     # (N, rp, cp, hb, wb, C)
    xr = xr.reshape(n, 2, 2, hb, wb * cin)                         # lane axis = W*C (dense)

    wb1, b1 = _fold_layer_banded(params[0], wo)
    wb2, b2 = _fold_layer_banded(params[1], wo)
    wb3, b3 = _fold_layer_banded(params[2], wo)

    kernel = functools.partial(_down_fused_kernel, ho, wo, cin, cmid)
    out = pl.pallas_call(
        kernel,
        out_shape=jax.ShapeDtypeStruct((n, ho, wo * cout), x_nchw.dtype),
        grid=(n,),
        in_specs=[
            pl.BlockSpec((1, 2, 2, hb, wb * cin), lambda i: (i, 0, 0, 0, 0)),
            pl.BlockSpec(wb1.shape, lambda i: (0, 0, 0)),
            pl.BlockSpec(b1.shape, lambda i: (0, 0)),
            pl.BlockSpec(wb2.shape, lambda i: (0, 0, 0)),
            pl.BlockSpec(b2.shape, lambda i: (0, 0)),
            pl.BlockSpec(wb3.shape, lambda i: (0, 0, 0)),
            pl.BlockSpec(b3.shape, lambda i: (0, 0)),
        ],
        out_specs=pl.BlockSpec((1, ho, wo * cout), lambda i: (i, 0, 0)),
        scratch_shapes=[
            pltpu.VMEM((ho + 2, (wo + 2) * cin), jnp.float32),    # padded pooled activation
            pltpu.VMEM((ho + 2, (wo + 2) * cmid), jnp.float32),   # padded conv activation (reused)
        ],
        compiler_params=pltpu.CompilerParams(dimension_semantics=("parallel",)),
    )(xr, wb1, b1, wb2, b2, wb3, b3)

    # lane-dense fused NHWC kernel output -> NCHW (tiny, output-sized reshape/transpose)
    return jnp.transpose(out.reshape(n, ho, wo, cout), (0, 3, 1, 2))


# --------------------------- parameter setup ---------------------------

def init_down_params(key, in_ch, out_ch):
    """Deterministic synthetic params matching Down(in_ch, out_ch) shapes."""
    mid = out_ch
    chans = [(in_ch, mid), (mid, mid), (mid, out_ch)]
    params = []
    for i, (ci, co) in enumerate(chans):
        k = jax.random.fold_in(key, i)
        kw, kb, kg, kbt, km, kv = jax.random.split(k, 6)
        bound = 1.0 / jnp.sqrt(ci * 9.0)
        params.append(dict(
            w=jax.random.uniform(kw, (co, ci, 3, 3), jnp.float32, -bound, bound),  # OIHW
            b=jax.random.uniform(kb, (co,), jnp.float32, -bound, bound),
            gamma=jax.random.uniform(kg, (co,), jnp.float32, 0.5, 1.5),
            beta=jax.random.uniform(kbt, (co,), jnp.float32, -0.1, 0.1),
            rmean=jax.random.normal(km, (co,), jnp.float32) * 0.1,
            rvar=jax.random.uniform(kv, (co,), jnp.float32, 0.5, 1.5),
        ))
    return params


# --------------------------- pure-JAX reference ---------------------------

def down_reference(x_nchw, params):
    neg = jnp.finfo(x_nchw.dtype).min
    x = lax.reduce_window(x_nchw, neg, lax.max, (1, 1, 3, 3), (1, 1, 2, 2),
                          padding=((0, 0), (0, 0), (1, 1), (1, 1)))
    for p in params:
        x = lax.conv_general_dilated(x, p["w"], (1, 1), ((1, 1), (1, 1)),
                                     dimension_numbers=("NCHW", "OIHW", "NCHW"))
        x = x + p["b"][None, :, None, None]
        scale = (p["gamma"] / jnp.sqrt(p["rvar"] + _BN_EPS))[None, :, None, None]
        x = (x - p["rmean"][None, :, None, None]) * scale + p["beta"][None, :, None, None]
        x = _mish_ref(x)
    return x


if __name__ == "__main__":
    key = jax.random.PRNGKey(0)
    kx, kp = jax.random.split(key)
    in_ch, out_ch = 4, 8
    x = jax.random.normal(kx, (2, in_ch, 16, 16), jnp.float32)     # NCHW, like PyTorch
    params = init_down_params(kp, in_ch, out_ch)

    y = jax.block_until_ready(jax.jit(down_forward)(x, params))
    y_ref = jax.block_until_ready(down_reference(x, params))

    assert y.shape == (2, out_ch, 8, 8), y.shape
    max_err = float(jnp.max(jnp.abs(y - y_ref)))
    assert jnp.allclose(y, y_ref, atol=2e-3, rtol=2e-3), max_err
    print("KERNEL_OK")
</pallas_src>

<mosaic_0001>
module attributes {stable_mosaic.version = 11 : i64} {
  func.func @_down_fused_kernel(%arg0: i32, %arg1: memref<1x2x2x9x36xf32, #tpu.memory_space<vmem>>, %arg2: memref<3x40x64xf32, #tpu.memory_space<vmem>>, %arg3: memref<1x64xf32, #tpu.memory_space<vmem>>, %arg4: memref<3x80x64xf32, #tpu.memory_space<vmem>>, %arg5: memref<1x64xf32, #tpu.memory_space<vmem>>, %arg6: memref<3x80x64xf32, #tpu.memory_space<vmem>>, %arg7: memref<1x64xf32, #tpu.memory_space<vmem>>, %arg8: memref<1x8x64xf32, #tpu.memory_space<vmem>>, %arg9: memref<10x40xf32, #tpu.memory_space<vmem>>, %arg10: memref<10x80xf32, #tpu.memory_space<vmem>>) attributes {dimension_semantics = [#tpu.dimension_semantics<parallel>], iteration_bounds = array<i64: 2>, scalar_prefetch = 0 : i64, scratch_operands = 2 : i64, tpu.core_type = #tpu.core_type<tc>, window_params = [{transform_indices = @transform_0, window_bounds = array<i64: 1, 2, 2, 9, 36>}, {pipeline_mode = #tpu.pipeline_mode<synchronous>, transform_indices = @transform_1, window_bounds = array<i64: 3, 40, 64>}, {pipeline_mode = #tpu.pipeline_mode<synchronous>, transform_indices = @transform_2, window_bounds = array<i64: 1, 64>}, {pipeline_mode = #tpu.pipeline_mode<synchronous>, transform_indices = @transform_3, window_bounds = array<i64: 3, 80, 64>}, {pipeline_mode = #tpu.pipeline_mode<synchronous>, transform_indices = @transform_4, window_bounds = array<i64: 1, 64>}, {pipeline_mode = #tpu.pipeline_mode<synchronous>, transform_indices = @transform_5, window_bounds = array<i64: 3, 80, 64>}, {pipeline_mode = #tpu.pipeline_mode<synchronous>, transform_indices = @transform_6, window_bounds = array<i64: 1, 64>}, {transform_indices = @transform_7, window_bounds = array<i64: 1, 8, 64>}]} {
    %c0 = arith.constant 0 : index
    %c0_0 = arith.constant 0 : index
    %c0_1 = arith.constant 0 : index
    %c0_2 = arith.constant 0 : index
    %c0_3 = arith.constant 0 : index
    %0 = vector.load %arg1[%c0, %c0_0, %c0_1, %c0_2, %c0_3] : memref<1x2x2x9x36xf32, #tpu.memory_space<vmem>>, vector<1x1x1x8x32xf32>
    %1 = vector.shape_cast %0 : vector<1x1x1x8x32xf32> to vector<8x32xf32>
    %c0_4 = arith.constant 0 : index
    %c0_5 = arith.constant 0 : index
    %c1 = arith.constant 1 : index
    %c0_6 = arith.constant 0 : index
    %c0_7 = arith.constant 0 : index
    %2 = vector.load %arg1[%c0_4, %c0_5, %c1, %c0_6, %c0_7] : memref<1x2x2x9x36xf32, #tpu.memory_space<vmem>>, vector<1x1x1x8x32xf32>
    %3 = vector.shape_cast %2 : vector<1x1x1x8x32xf32> to vector<8x32xf32>
    %4 = arith.maximumf %1, %3 : vector<8x32xf32>
    %c0_8 = arith.constant 0 : index
    %c0_9 = arith.constant 0 : index
    %c0_10 = arith.constant 0 : index
    %c0_11 = arith.constant 0 : index
    %c4 = arith.constant 4 : index
    %5 = vector.load %arg1[%c0_8, %c0_9, %c0_10, %c0_11, %c4] : memref<1x2x2x9x36xf32, #tpu.memory_space<vmem>>, vector<1x1x1x8x32xf32>
    %6 = vector.shape_cast %5 : vector<1x1x1x8x32xf32> to vector<8x32xf32>
    %7 = arith.maximumf %4, %6 : vector<8x32xf32>
    %c0_12 = arith.constant 0 : index
    %c1_13 = arith.constant 1 : index
    %c0_14 = arith.constant 0 : index
    %c0_15 = arith.constant 0 : index
    %c0_16 = arith.constant 0 : index
    %8 = vector.load %arg1[%c0_12, %c1_13, %c0_14, %c0_15, %c0_16] : memref<1x2x2x9x36xf32, #tpu.memory_space<vmem>>, vector<1x1x1x8x32xf32>
    %9 = vector.shape_cast %8 : vector<1x1x1x8x32xf32> to vector<8x32xf32>
    %10 = arith.maximumf %7, %9 : vector<8x32xf32>
    %c0_17 = arith.constant 0 : index
    %c1_18 = arith.constant 1 : index
    %c1_19 = arith.constant 1 : index
    %c0_20 = arith.constant 0 : index
    %c0_21 = arith.constant 0 : index
    %11 = vector.load %arg1[%c0_17, %c1_18, %c1_19, %c0_20, %c0_21] : memref<1x2x2x9x36xf32, #tpu.memory_space<vmem>>, vector<1x1x1x8x32xf32>
    %12 = vector.shape_cast %11 : vector<1x1x1x8x32xf32> to vector<8x32xf32>
    %13 = arith.maximumf %10, %12 : vector<8x32xf32>
    %c0_22 = arith.constant 0 : index
    %c1_23 = arith.constant 1 : index
    %c0_24 = arith.constant 0 : index
    %c0_25 = arith.constant 0 : index
    %c4_26 = arith.constant 4 : index
    %14 = vector.load %arg1[%c0_22, %c1_23, %c0_24, %c0_25, %c4_26] : memref<1x2x2x9x36xf32, #tpu.memory_space<vmem>>, vector<1x1x1x8x32xf32>
    %15 = vector.shape_cast %14 : vector<1x1x1x8x32xf32> to vector<8x32xf32>
    %16 = arith.maximumf %13, %15 : vector<8x32xf32>
    %c0_27 = arith.constant 0 : index
    %c0_28 = arith.constant 0 : index
    %c0_29 = arith.constant 0 : index
    %c1_30 = arith.constant 1 : index
    %c0_31 = arith.constant 0 : index
    %17 = vector.load %arg1[%c0_27, %c0_28, %c0_29, %c1_30, %c0_31] : memref<1x2x2x9x36xf32, #tpu.memory_space<vmem>>, vector<1x1x1x8x32xf32>
    %18 = vector.shape_cast %17 : vector<1x1x1x8x32xf32> to vector<8x32xf32>
    %19 = arith.maximumf %16, %18 : vector<8x32xf32>
    %c0_32 = arith.constant 0 : index
    %c0_33 = arith.constant 0 : index
    %c1_34 = arith.constant 1 : index
    %c1_35 = arith.constant 1 : index
    %c0_36 = arith.constant 0 : index
    %20 = vector.load %arg1[%c0_32, %c0_33, %c1_34, %c1_35, %c0_36] : memref<1x2x2x9x36xf32, #tpu.memory_space<vmem>>, vector<1x1x1x8x32xf32>
    %21 = vector.shape_cast %20 : vector<1x1x1x8x32xf32> to vector<8x32xf32>
    %22 = arith.maximumf %19, %21 : vector<8x32xf32>
    %c0_37 = arith.constant 0 : index
    %c0_38 = arith.constant 0 : index
    %c0_39 = arith.constant 0 : index
    %c1_40 = arith.constant 1 : index
    %c4_41 = arith.constant 4 : index
    %23 = vector.load %arg1[%c0_37, %c0_38, %c0_39, %c1_40, %c4_41] : memref<1x2x2x9x36xf32, #tpu.memory_space<vmem>>, vector<1x1x1x8x32xf32>
    %24 = vector.shape_cast %23 : vector<1x1x1x8x32xf32> to vector<8x32xf32>
    %25 = arith.maximumf %22, %24 : vector<8x32xf32>
    %cst = arith.constant 0.000000e+00 : f32
    %26 = vector.broadcast %cst : f32 to vector<1x40xf32>
    %c0_42 = arith.constant 0 : index
    %c0_43 = arith.constant 0 : index
    %27 = vector.load %arg9[%c0_42, %c0_43] : memref<10x40xf32, #tpu.memory_space<vmem>>, vector<1x40xf32>
    tpu.vector_store %arg9[%c0_42, %c0_43], %26 {strides = array<i32>} : memref<10x40xf32, #tpu.memory_space<vmem>>, vector<1x40xf32>,
    %cst_44 = arith.constant 0.000000e+00 : f32
    %28 = vector.broadcast %cst_44 : f32 to vector<1x40xf32>
    %c9 = arith.constant 9 : index
    %c0_45 = arith.constant 0 : index
    %29 = vector.load %arg9[%c9, %c0_45] : memref<10x40xf32, #tpu.memory_space<vmem>>, vector<1x40xf32>
    tpu.vector_store %arg9[%c9, %c0_45], %28 {strides = array<i32>} : memref<10x40xf32, #tpu.memory_space<vmem>>, vector<1x40xf32>,
    %cst_46 = arith.constant 0.000000e+00 : f32
    %30 = vector.broadcast %cst_46 : f32 to vector<10x4xf32>
    %c0_47 = arith.constant 0 : index
    %c0_48 = arith.constant 0 : index
    %31 = vector.load %arg9[%c0_47, %c0_48] : memref<10x40xf32, #tpu.memory_space<vmem>>, vector<10x4xf32>
    tpu.vector_store %arg9[%c0_47, %c0_48], %30 {strides = array<i32>} : memref<10x40xf32, #tpu.memory_space<vmem>>, vector<10x4xf32>,
    %cst_49 = arith.constant 0.000000e+00 : f32
    %32 = vector.broadcast %cst_49 : f32 to vector<10x4xf32>
    %c0_50 = arith.constant 0 : index
    %c36 = arith.constant 36 : index
    %33 = vector.load %arg9[%c0_50, %c36] : memref<10x40xf32, #tpu.memory_space<vmem>>, vector<10x4xf32>
    tpu.vector_store %arg9[%c0_50, %c36], %32 {strides = array<i32>} : memref<10x40xf32, #tpu.memory_space<vmem>>, vector<10x4xf32>,
    %c1_51 = arith.constant 1 : index
    %c4_52 = arith.constant 4 : index
    %34 = vector.load %arg9[%c1_51, %c4_52] : memref<10x40xf32, #tpu.memory_space<vmem>>, vector<8x32xf32>
    tpu.vector_store %arg9[%c1_51, %c4_52], %25 {strides = array<i32>} : memref<10x40xf32, #tpu.memory_space<vmem>>, vector<8x32xf32>,
    %c0_53 = arith.constant 0 : index
    %c0_54 = arith.constant 0 : index
    %35 = vector.load %arg9[%c0_53, %c0_54] : memref<10x40xf32, #tpu.memory_space<vmem>>, vector<8x40xf32>
    %c0_55 = arith.constant 0 : index
    %c0_56 = arith.constant 0 : index
    %c0_57 = arith.constant 0 : index
    %36 = vector.load %arg2[%c0_55, %c0_56, %c0_57] : memref<3x40x64xf32, #tpu.memory_space<vmem>>, vector<1x40x64xf32>
    %37 = vector.shape_cast %36 : vector<1x40x64xf32> to vector<40x64xf32>
    %cst_58 = arith.constant dense<0.000000e+00> : vector<8x64xf32>
    %38 = tpu.matmul %35, %37, %cst_58 {dimension_numbers = #tpu.dot_dimension_numbers<[1], [0], [0], [1], [0, 0, 1, 1], [], []>} : vector<8x40xf32>, vector<40x64xf32>, vector<8x64xf32> -> vector<8x64xf32>
    %c1_59 = arith.constant 1 : index
    %c0_60 = arith.constant 0 : index
    %39 = vector.load %arg9[%c1_59, %c0_60] : memref<10x40xf32, #tpu.memory_space<vmem>>, vector<8x40xf32>
    %c1_61 = arith.constant 1 : index
    %c0_62 = arith.constant 0 : index
    %c0_63 = arith.constant 0 : index
    %40 = vector.load %arg2[%c1_61, %c0_62, %c0_63] : memref<3x40x64xf32, #tpu.memory_space<vmem>>, vector<1x40x64xf32>
    %41 = vector.shape_cast %40 : vector<1x40x64xf32> to vector<40x64xf32>
    %cst_64 = arith.constant dense<0.000000e+00> : vector<8x64xf32>
    %42 = tpu.matmul %39, %41, %cst_64 {dimension_numbers = #tpu.dot_dimension_numbers<[1], [0], [0], [1], [0, 0, 1, 1], [], []>} : vector<8x40xf32>, vector<40x64xf32>, vector<8x64xf32> -> vector<8x64xf32>
    %43 = arith.addf %38, %42 : vector<8x64xf32>
    %c2 = arith.constant 2 : index
    %c0_65 = arith.constant 0 : index
    %44 = vector.load %arg9[%c2, %c0_65] : memref<10x40xf32, #tpu.memory_space<vmem>>, vector<8x40xf32>
    %c2_66 = arith.constant 2 : index
    %c0_67 = arith.constant 0 : index
    %c0_68 = arith.constant 0 : index
    %45 = vector.load %arg2[%c2_66, %c0_67, %c0_68] : memref<3x40x64xf32, #tpu.memory_space<vmem>>, vector<1x40x64xf32>
    %46 = vector.shape_cast %45 : vector<1x40x64xf32> to vector<40x64xf32>
    %cst_69 = arith.constant dense<0.000000e+00> : vector<8x64xf32>
    %47 = tpu.matmul %44, %46, %cst_69 {dimension_numbers = #tpu.dot_dimension_numbers<[1], [0], [0], [1], [0, 0, 1, 1], [], []>} : vector<8x40xf32>, vector<40x64xf32>, vector<8x64xf32> -> vector<8x64xf32>
    %48 = arith.addf %43, %47 : vector<8x64xf32>
    %c0_70 = arith.constant 0 : index
    %c0_71 = arith.constant 0 : index
    %49 = vector.load %arg3[%c0_70, %c0_71] : memref<1x64xf32, #tpu.memory_space<vmem>>, vector<1x64xf32>
    %50 = vector.broadcast %49 : vector<1x64xf32> to vector<8x64xf32>
    %51 = arith.addf %48, %50 : vector<8x64xf32>
    %cst_72 = arith.constant 2.500000e+01 : f32
    %52 = vector.broadcast %cst_72 : f32 to vector<8x64xf32>
    %53 = arith.minimumf %51, %52 : vector<8x64xf32>
    %54 = math.exp %53 : vector<8x64xf32>
    %cst_73 = arith.constant 2.000000e+00 : f32
    %55 = vector.broadcast %cst_73 : f32 to vector<8x64xf32>
    %56 = arith.addf %54, %55 : vector<8x64xf32>
    %57 = arith.mulf %54, %56 : vector<8x64xf32>
    %58 = arith.mulf %51, %57 : vector<8x64xf32>
    %cst_74 = arith.constant 2.000000e+00 : f32
    %59 = vector.broadcast %cst_74 : f32 to vector<8x64xf32>
    %60 = arith.addf %57, %59 : vector<8x64xf32>
    %61 = tpu.reciprocal %60 {approx = true} : vector<8x64xf32> -> vector<8x64xf32>
    %62 = arith.mulf %58, %61 : vector<8x64xf32>
    %cst_75 = arith.constant 0.000000e+00 : f32
    %63 = vector.broadcast %cst_75 : f32 to vector<1x80xf32>
    %c0_76 = arith.constant 0 : index
    %c0_77 = arith.constant 0 : index
    %64 = vector.load %arg10[%c0_76, %c0_77] : memref<10x80xf32, #tpu.memory_space<vmem>>, vector<1x80xf32>
    tpu.vector_store %arg10[%c0_76, %c0_77], %63 {strides = array<i32>} : memref<10x80xf32, #tpu.memory_space<vmem>>, vector<1x80xf32>,
    %cst_78 = arith.constant 0.000000e+00 : f32
    %65 = vector.broadcast %cst_78 : f32 to vector<1x80xf32>
    %c9_79 = arith.constant 9 : index
    %c0_80 = arith.constant 0 : index
    %66 = vector.load %arg10[%c9_79, %c0_80] : memref<10x80xf32, #tpu.memory_space<vmem>>, vector<1x80xf32>
    tpu.vector_store %arg10[%c9_79, %c0_80], %65 {strides = array<i32>} : memref<10x80xf32, #tpu.memory_space<vmem>>, vector<1x80xf32>,
    %cst_81 = arith.constant 0.000000e+00 : f32
    %67 = vector.broadcast %cst_81 : f32 to vector<10x8xf32>
    %c0_82 = arith.constant 0 : index
    %c0_83 = arith.constant 0 : index
    %68 = vector.load %arg10[%c0_82, %c0_83] : memref<10x80xf32, #tpu.memory_space<vmem>>, vector<10x8xf32>
    tpu.vector_store %arg10[%c0_82, %c0_83], %67 {strides = array<i32>} : memref<10x80xf32, #tpu.memory_space<vmem>>, vector<10x8xf32>,
    %cst_84 = arith.constant 0.000000e+00 : f32
    %69 = vector.broadcast %cst_84 : f32 to vector<10x8xf32>
    %c0_85 = arith.constant 0 : index
    %c72 = arith.constant 72 : index
    %70 = vector.load %arg10[%c0_85, %c72] : memref<10x80xf32, #tpu.memory_space<vmem>>, vector<10x8xf32>
    tpu.vector_store %arg10[%c0_85, %c72], %69 {strides = array<i32>} : memref<10x80xf32, #tpu.memory_space<vmem>>, vector<10x8xf32>,
    %c1_86 = arith.constant 1 : index
    %c8 = arith.constant 8 : index
    %71 = vector.load %arg10[%c1_86, %c8] : memref<10x80xf32, #tpu.memory_space<vmem>>, vector<8x64xf32>
    tpu.vector_store %arg10[%c1_86, %c8], %62 {strides = array<i32>} : memref<10x80xf32, #tpu.memory_space<vmem>>, vector<8x64xf32>,
    %c0_87 = arith.constant 0 : index
    %c0_88 = arith.constant 0 : index
    %72 = vector.load %arg10[%c0_87, %c0_88] : memref<10x80xf32, #tpu.memory_space<vmem>>, vector<8x80xf32>
    %c0_89 = arith.constant 0 : index
    %c0_90 = arith.constant 0 : index
    %c0_91 = arith.constant 0 : index
    %73 = vector.load %arg4[%c0_89, %c0_90, %c0_91] : memref<3x80x64xf32, #tpu.memory_space<vmem>>, vector<1x80x64xf32>
    %74 = vector.shape_cast %73 : vector<1x80x64xf32> to vector<80x64xf32>
    %cst_92 = arith.constant dense<0.000000e+00> : vector<8x64xf32>
    %75 = tpu.matmul %72, %74, %cst_92 {dimension_numbers = #tpu.dot_dimension_numbers<[1], [0], [0], [1], [0, 0, 1, 1], [], []>} : vector<8x80xf32>, vector<80x64xf32>, vector<8x64xf32> -> vector<8x64xf32>
    %c1_93 = arith.constant 1 : index
    %c0_94 = arith.constant 0 : index
    %76 = vector.load %arg10[%c1_93, %c0_94] : memref<10x80xf32, #tpu.memory_space<vmem>>, vector<8x80xf32>
    %c1_95 = arith.constant 1 : index
    %c0_96 = arith.constant 0 : index
    %c0_97 = arith.constant 0 : index
    %77 = vector.load %arg4[%c1_95, %c0_96, %c0_97] : memref<3x80x64xf32, #tpu.memory_space<vmem>>, vector<1x80x64xf32>
    %78 = vector.shape_cast %77 : vector<1x80x64xf32> to vector<80x64xf32>
    %cst_98 = arith.constant dense<0.000000e+00> : vector<8x64xf32>
    %79 = tpu.matmul %76, %78, %cst_98 {dimension_numbers = #tpu.dot_dimension_numbers<[1], [0], [0], [1], [0, 0, 1, 1], [], []>} : vector<8x80xf32>, vector<80x64xf32>, vector<8x64xf32> -> vector<8x64xf32>
    %80 = arith.addf %75, %79 : vector<8x64xf32>
    %c2_99 = arith.constant 2 : index
    %c0_100 = arith.constant 0 : index
    %81 = vector.load %arg10[%c2_99, %c0_100] : memref<10x80xf32, #tpu.memory_space<vmem>>, vector<8x80xf32>
    %c2_101 = arith.constant 2 : index
    %c0_102 = arith.constant 0 : index
    %c0_103 = arith.constant 0 : index
    %82 = vector.load %arg4[%c2_101, %c0_102, %c0_103] : memref<3x80x64xf32, #tpu.memory_space<vmem>>, vector<1x80x64xf32>
    %83 = vector.shape_cast %82 : vector<1x80x64xf32> to vector<80x64xf32>
    %cst_104 = arith.constant dense<0.000000e+00> : vector<8x64xf32>
    %84 = tpu.matmul %81, %83, %cst_104 {dimension_numbers = #tpu.dot_dimension_numbers<[1], [0], [0], [1], [0, 0, 1, 1], [], []>} : vector<8x80xf32>, vector<80x64xf32>, vector<8x64xf32> -> vector<8x64xf32>
    %85 = arith.addf %80, %84 : vector<8x64xf32>
    %c0_105 = arith.constant 0 : index
    %c0_106 = arith.constant 0 : index
    %86 = vector.load %arg5[%c0_105, %c0_106] : memref<1x64xf32, #tpu.memory_space<vmem>>, vector<1x64xf32>
    %87 = vector.broadcast %86 : vector<1x64xf32> to vector<8x64xf32>
    %88 = arith.addf %85, %87 : vector<8x64xf32>
    %cst_107 = arith.constant 2.500000e+01 : f32
    %89 = vector.broadcast %cst_107 : f32 to vector<8x64xf32>
    %90 = arith.minimumf %88, %89 : vector<8x64xf32>
    %91 = math.exp %90 : vector<8x64xf32>
    %cst_108 = arith.constant 2.000000e+00 : f32
    %92 = vector.broadcast %cst_108 : f32 to vector<8x64xf32>
    %93 = arith.addf %91, %92 : vector<8x64xf32>
    %94 = arith.mulf %91, %93 : vector<8x64xf32>
    %95 = arith.mulf %88, %94 : vector<8x64xf32>
    %cst_109 = arith.constant 2.000000e+00 : f32
    %96 = vector.broadcast %cst_109 : f32 to vector<8x64xf32>
    %97 = arith.addf %94, %96 : vector<8x64xf32>
    %98 = tpu.reciprocal %97 {approx = true} : vector<8x64xf32> -> vector<8x64xf32>
    %99 = arith.mulf %95, %98 : vector<8x64xf32>
    %c1_110 = arith.constant 1 : index
    %c8_111 = arith.constant 8 : index
    %100 = vector.load %arg10[%c1_110, %c8_111] : memref<10x80xf32, #tpu.memory_space<vmem>>, vector<8x64xf32>
    tpu.vector_store %arg10[%c1_110, %c8_111], %99 {strides = array<i32>} : memref<10x80xf32, #tpu.memory_space<vmem>>, vector<8x64xf32>,
    %c0_112 = arith.constant 0 : index
    %c0_113 = arith.constant 0 : index
    %101 = vector.load %arg10[%c0_112, %c0_113] : memref<10x80xf32, #tpu.memory_space<vmem>>, vector<8x80xf32>
    %c0_114 = arith.constant 0 : index
    %c0_115 = arith.constant 0 : index
    %c0_116 = arith.constant 0 : index
    %102 = vector.load %arg6[%c0_114, %c0_115, %c0_116] : memref<3x80x64xf32, #tpu.memory_space<vmem>>, vector<1x80x64xf32>
    %103 = vector.shape_cast %102 : vector<1x80x64xf32> to vector<80x64xf32>
    %cst_117 = arith.constant dense<0.000000e+00> : vector<8x64xf32>
    %104 = tpu.matmul %101, %103, %cst_117 {dimension_numbers = #tpu.dot_dimension_numbers<[1], [0], [0], [1], [0, 0, 1, 1], [], []>} : vector<8x80xf32>, vector<80x64xf32>, vector<8x64xf32> -> vector<8x64xf32>
    %c1_118 = arith.constant 1 : index
    %c0_119 = arith.constant 0 : index
    %105 = vector.load %arg10[%c1_118, %c0_119] : memref<10x80xf32, #tpu.memory_space<vmem>>, vector<8x80xf32>
    %c1_120 = arith.constant 1 : index
    %c0_121 = arith.constant 0 : index
    %c0_122 = arith.constant 0 : index
    %106 = vector.load %arg6[%c1_120, %c0_121, %c0_122] : memref<3x80x64xf32, #tpu.memory_space<vmem>>, vector<1x80x64xf32>
    %107 = vector.shape_cast %106 : vector<1x80x64xf32> to vector<80x64xf32>
    %cst_123 = arith.constant dense<0.000000e+00> : vector<8x64xf32>
    %108 = tpu.matmul %105, %107, %cst_123 {dimension_numbers = #tpu.dot_dimension_numbers<[1], [0], [0], [1], [0, 0, 1, 1], [], []>} : vector<8x80xf32>, vector<80x64xf32>, vector<8x64xf32> -> vector<8x64xf32>
    %109 = arith.addf %104, %108 : vector<8x64xf32>
    %c2_124 = arith.constant 2 : index
    %c0_125 = arith.constant 0 : index
    %110 = vector.load %arg10[%c2_124, %c0_125] : memref<10x80xf32, #tpu.memory_space<vmem>>, vector<8x80xf32>
    %c2_126 = arith.constant 2 : index
    %c0_127 = arith.constant 0 : index
    %c0_128 = arith.constant 0 : index
    %111 = vector.load %arg6[%c2_126, %c0_127, %c0_128] : memref<3x80x64xf32, #tpu.memory_space<vmem>>, vector<1x80x64xf32>
    %112 = vector.shape_cast %111 : vector<1x80x64xf32> to vector<80x64xf32>
    %cst_129 = arith.constant dense<0.000000e+00> : vector<8x64xf32>
    %113 = tpu.matmul %110, %112, %cst_129 {dimension_numbers = #tpu.dot_dimension_numbers<[1], [0], [0], [1], [0, 0, 1, 1], [], []>} : vector<8x80xf32>, vector<80x64xf32>, vector<8x64xf32> -> vector<8x64xf32>
    %114 = arith.addf %109, %113 : vector<8x64xf32>
    %c0_130 = arith.constant 0 : index
    %c0_131 = arith.constant 0 : index
    %115 = vector.load %arg7[%c0_130, %c0_131] : memref<1x64xf32, #tpu.memory_space<vmem>>, vector<1x64xf32>
    %116 = vector.broadcast %115 : vector<1x64xf32> to vector<8x64xf32>
    %117 = arith.addf %114, %116 : vector<8x64xf32>
    %cst_132 = arith.constant 2.500000e+01 : f32
    %118 = vector.broadcast %cst_132 : f32 to vector<8x64xf32>
    %119 = arith.minimumf %117, %118 : vector<8x64xf32>
    %120 = math.exp %119 : vector<8x64xf32>
    %cst_133 = arith.constant 2.000000e+00 : f32
    %121 = vector.broadcast %cst_133 : f32 to vector<8x64xf32>
    %122 = arith.addf %120, %121 : vector<8x64xf32>
    %123 = arith.mulf %120, %122 : vector<8x64xf32>
    %124 = arith.mulf %117, %123 : vector<8x64xf32>
    %cst_134 = arith.constant 2.000000e+00 : f32
    %125 = vector.broadcast %cst_134 : f32 to vector<8x64xf32>
    %126 = arith.addf %123, %125 : vector<8x64xf32>
    %127 = tpu.reciprocal %126 {approx = true} : vector<8x64xf32> -> vector<8x64xf32>
    %128 = arith.mulf %124, %127 : vector<8x64xf32>
    %c0_135 = arith.constant 0 : index
    %c0_136 = arith.constant 0 : index
    %c0_137 = arith.constant 0 : index
    %129 = vector.load %arg8[%c0_135, %c0_136, %c0_137] : memref<1x8x64xf32, #tpu.memory_space<vmem>>, vector<1x8x64xf32>
    %130 = vector.shape_cast %129 : vector<1x8x64xf32> to vector<8x64xf32>
    %131 = vector.shape_cast %128 : vector<8x64xf32> to vector<1x8x64xf32>
    tpu.vector_store %arg8[%c0_135, %c0_136, %c0_137], %131 {strides = array<i32>} : memref<1x8x64xf32, #tpu.memory_space<vmem>>, vector<1x8x64xf32>,
    return
  }
  func.func @transform_0(%arg0: i32) -> (i32, i32, i32, i32, i32) {
    %c0_i32 = arith.constant 0 : i32
    %c0_i32_0 = arith.constant 0 : i32
    %c0_i32_1 = arith.constant 0 : i32
    %c0_i32_2 = arith.constant 0 : i32
    %c0_i32_3 = arith.constant 0 : i32
    return %arg0, %c0_i32, %c0_i32_0, %c0_i32_1, %c0_i32_2 : i32, i32, i32, i32, i32
  }
  func.func @transform_1(%arg0: i32) -> (i32, i32, i32) {
    %c0_i32 = arith.constant 0 : i32
    %c0_i32_0 = arith.constant 0 : i32
    %c0_i32_1 = arith.constant 0 : i32
    %c0_i32_2 = arith.constant 0 : i32
    return %c0_i32, %c0_i32_0, %c0_i32_1 : i32, i32, i32
  }
  func.func @transform_2(%arg0: i32) -> (i32, i32) {
    %c0_i32 = arith.constant 0 : i32
    %c0_i32_0 = arith.constant 0 : i32
    %c0_i32_1 = arith.constant 0 : i32
    return %c0_i32, %c0_i32_0 : i32, i32
  }
  func.func @transform_3(%arg0: i32) -> (i32, i32, i32) {
    %c0_i32 = arith.constant 0 : i32
    %c0_i32_0 = arith.constant 0 : i32
    %c0_i32_1 = arith.constant 0 : i32
    %c0_i32_2 = arith.constant 0 : i32
    return %c0_i32, %c0_i32_0, %c0_i32_1 : i32, i32, i32
  }
  func.func @transform_4(%arg0: i32) -> (i32, i32) {
    %c0_i32 = arith.constant 0 : i32
    %c0_i32_0 = arith.constant 0 : i32
    %c0_i32_1 = arith.constant 0 : i32
    return %c0_i32, %c0_i32_0 : i32, i32
  }
  func.func @transform_5(%arg0: i32) -> (i32, i32, i32) {
    %c0_i32 = arith.constant 0 : i32
    %c0_i32_0 = arith.constant 0 : i32
    %c0_i32_1 = arith.constant 0 : i32
    %c0_i32_2 = arith.constant 0 : i32
    return %c0_i32, %c0_i32_0, %c0_i32_1 : i32, i32, i32
  }
  func.func @transform_6(%arg0: i32) -> (i32, i32) {
    %c0_i32 = arith.constant 0 : i32
    %c0_i32_0 = arith.constant 0 : i32
    %c0_i32_1 = arith.constant 0 : i32
    return %c0_i32, %c0_i32_0 : i32, i32
  }
  func.func @transform_7(%arg0: i32) -> (i32, i32, i32) {
    %c0_i32 = arith.constant 0 : i32
    %c0_i32_0 = arith.constant 0 : i32
    %c0_i32_1 = arith.constant 0 : i32
    return %arg0, %c0_i32, %c0_i32_0 : i32, i32, i32
  }
}

</mosaic_0001>

<llo_original>
// kernel: tile.18
$region0: #{tile.18}
  #allocation0 [shape = 's32[1]{0}', space=sflag, size = 0x4, scoped, tag = 'scoped memory for tile.18']
  %s0 = inlined_call_operand.vmem [shape: f32[8], index: 0, kind: input, shape index: {}]
  %s1 = inlined_call_operand.vmem [shape: f32[8,8], index: 1, kind: output, shape index: {}]
  // Predicated region
  $region2: #{tile.18} parent=0 // pred_check
    _
  $region3: #{tile.18} parent=0 // pred_check_branch
    %3 = sbr.rel (0) target = $region5
  $region4: #{tile.18} parent=0 // pred_region
    _
  $region5: #{tile.18} parent=0 // pred_fallthru
    _
  %v4 = vld [vmem:[%s0] ss:$0 sm:$0xff]
  %5 = vst [vmem:[%s1] sm:$0xff] %v4

// kernel: tile.19
$region0: #{tile.19}
  %s0 = inlined_call_operand.vmem [shape: f32[8,8], index: 0, kind: input, shape index: {}]
  %s1 = inlined_call_operand.vmem [shape: f32[1,64], index: 1, kind: output, shape index: {}]
  $region1: #{tile.19} parent=0
    #allocation0 [shape = 'u8[4096]{0}', space=vmem, size = 0x1000, scoped, tag = 'scoped mem for output reshape']
    %v2 = vld [vmem:[%s0] sm:$0x1]
    %vm3 = vcmask 64512
    %4 = vst.msk [vmem:[#allocation0] sm:$0x1] %vm3, %v2
    %s5 = scalar_lea.vmem %s0, 7
    %v6 = vld [vmem:[%s5] sm:$0x1]
    %7 = vrot.lane.b32.xlu0 %v6, 56
    %v8 = vpop.permute.xlu0 %7
    %vm9 = vcmask 523712
    %10 = vst.msk [vmem:[#allocation0] sm:$0x1] %vm9, %v8
    %s11 = scalar_lea.vmem %s0, 6
    %v12 = vld [vmem:[%s11] sm:$0x1]
    %13 = vrot.lane.b32.xlu0 %v12, 48
    %v14 = vpop.permute.xlu0 %13
    %vm15 = vcmask 458112
    %16 = vst.msk [vmem:[#allocation0] sm:$0x1] %vm15, %v14
    %s17 = scalar_lea.vmem %s0, 5
    %v18 = vld [vmem:[%s17] sm:$0x1]
    %19 = vrot.lane.b32.xlu0 %v18, 40
    %v20 = vpop.permute.xlu0 %19
    %vm21 = vcmask 392512
    %22 = vst.msk [vmem:[#allocation0] sm:$0x1] %vm21, %v20
    %s23 = scalar_lea.vmem %s0, 4
    %v24 = vld [vmem:[%s23] sm:$0x1]
    %25 = vrot.lane.b32.xlu0 %v24, 32
    %v26 = vpop.permute.xlu0 %25
    %vm27 = vcmask 326912
    %28 = vst.msk [vmem:[#allocation0] sm:$0x1] %vm27, %v26
    %s29 = scalar_lea.vmem %s0, 3
    %v30 = vld [vmem:[%s29] sm:$0x1]
    %31 = vrot.lane.b32.xlu0 %v30, 24
    %v32 = vpop.permute.xlu0 %31
    %vm33 = vcmask 261312
    %34 = vst.msk [vmem:[#allocation0] sm:$0x1] %vm33, %v32
    %s35 = scalar_lea.vmem %s0, 2
    %v36 = vld [vmem:[%s35] sm:$0x1]
    %37 = vrot.lane.b32.xlu0 %v36, 16
    %v38 = vpop.permute.xlu0 %37
    %vm39 = vcmask 195712
    %40 = vst.msk [vmem:[#allocation0] sm:$0x1] %vm39, %v38
    %s41 = scalar_lea.vmem %s0, 1
    %v42 = vld [vmem:[%s41] sm:$0x1]
    %43 = vrot.lane.b32.xlu0 %v42, 8
    %v44 = vpop.permute.xlu0 %43
    %vm45 = vcmask 130112
    %46 = vst.msk [vmem:[#allocation0] sm:$0x1] %vm45, %v44
    %s48 = sshllo.u32 0, 1
    %v50 = vld [vmem:[#allocation0] sm:%s48]
    %s51 = sshllo.u32 0, 1
    %52 = vst [vmem:[%s1] sm:%s51] %v50

// kernel: down_forward.1
$region0: #{down_forward.1}
  #allocation0 [shape = 'u32[]', space=smem, size = 0x4, offset = 0x4, fixed_abs, tag = 'smem constant byte address 0x4 - core index']
  #allocation1 [shape = 'u32[144,128]{1,0:T(1,128)}', space=vmem, size = 0x12000, scoped, tag = 'internal scratch']
  #allocation2 [shape = 'f32[10,40]{1,0:T(8,128)}', space=vmem, size = 0x2000, scoped, tag = 'scratch operand']
  #allocation3 [shape = 'f32[10,80]{1,0:T(8,128)}', space=vmem, size = 0x2000, scoped, tag = 'scratch operand']
  %s0 = inlined_call_operand.vmem [shape: f32[2,2,2,9,36], index: 0, kind: input, shape index: {}]
  %s1 = inlined_call_operand.vmem [shape: f32[3,40,64], index: 1, kind: input, shape index: {}]
  %s2 = inlined_call_operand.vmem [shape: f32[1,64], index: 2, kind: input, shape index: {}]
  %s3 = inlined_call_operand.vmem [shape: f32[3,80,64], index: 3, kind: input, shape index: {}]
  %s4 = inlined_call_operand.vmem [shape: f32[1,64], index: 4, kind: input, shape index: {}]
  %s5 = inlined_call_operand.vmem [shape: f32[3,80,64], index: 5, kind: input, shape index: {}]
  %s6 = inlined_call_operand.vmem [shape: f32[1,64], index: 6, kind: input, shape index: {}]
  %s7 = inlined_call_operand.vmem [shape: f32[2,8,64], index: 7, kind: output, shape index: {}]
  %s8 = sld [smem:[#allocation0]]
  $region61: #{down_forward.1} parent=0
    _
  %s10 = ssub.s32 1, %s8
  %s11 = scalar_select 0, %s10, %s8
  loop: start=0, step=1, limit=4
  $region2: #{down_forward.1} parent=0 // loop_pre_header
    _
  $region3: #{down_forward.1} parent=0 // loop_header
    %s13 = sphi 0, %s17
    %p14 = scmp.ge.s32.totalorder %s13, 4
    %s23 = sphi 0, %s25
    %s26 = sphi 0, %s23
    %s27 = sphi 0, %s26
    %s43 = sphi 0, %s27
    %s47 = sphi 0, %s47
    %s49 = sphi 0, %s47
    %s50 = sphi 0, %s49
    %s64 = sphi 0, %s50
    %s68 = sphi 0, %s68
    %s70 = sphi 0, %s68
    %s71 = sphi 0, %s70
    %s85 = sphi 0, %s71
    %s89 = sphi 0, %s89
    %s91 = sphi 0, %s89
    %s92 = sphi 0, %s91
    %s106 = sphi 0, %s92
    %s110 = sphi 0, %s110
    %s112 = sphi 0, %s110
    %s113 = sphi 0, %s112
    %s127 = sphi 0, %s113
    %s131 = sphi 0, %s131
    %s133 = sphi 0, %s131
    %s134 = sphi 0, %s133
    %s148 = sphi 0, %s134
    %s152 = sphi 0, %s152
    %s154 = sphi 0, %s152
    %s155 = sphi 0, %s154
    %s169 = sphi 0, %s155
    %s175 = sphi 0, %s177
    %s178 = sphi 0, %s175
    %s179 = sphi 0, %s178
    %s195 = sphi 0, %s179
  $region4: #{down_forward.1} parent=0 // loop_header_branch
    %16 = sbr.rel (%p14) target = $region8
  $region5: #{down_forward.1} parent=0 // loop_body
    %s18 = ssub.s32 %s13, 1
    %s19 = ssub.s32 %s13, 2
    %s20 = sadd.s32 %s13, 1
    %s21 = ssub.s32 %s13, %s20
    %p22 = scmp.eq.s32.totalorder %s21, 0
    %s24 = sadd.s32 %s23, 1
    %s25 = scalar_select %p22, %s23, %s24
    %p28 = pneg %p22
    %p29 = scmp.eq.s32.totalorder %s13, 1
    %p30 = por %p28, %p29
    %p31 = scmp.ne.s32.totalorder %s23, %s26
    %p32 = scmp.eq.s32.totalorder %s13, 0
    %p33 = por %p31, %p32
    %p34 = scmp.ne.s32.totalorder %s23, %s26
    %p35 = scmp.eq.s32.totalorder %s18, 1
    %p36 = por %p34, %p35
    %p37 = scmp.ne.s32.totalorder %s26, %s27
    %p38 = scmp.eq.s32.totalorder %s18, 0
    %p39 = por %p37, %p38
    %p40 = scmp.ne.s32.totalorder %s26, %s27
    %p41 = scmp.eq.s32.totalorder %s19, 1
    %p42 = por %p40, %p41
    %p44 = scmp.ne.s32.totalorder %s27, %s43
    %p45 = scmp.eq.s32.totalorder %s19, 0
    %p46 = por %p44, %p45
    %s48 = sadd.s32 %s47, 1
    %p51 = scmp.eq.s32.totalorder %s13, 1
    %p52 = scmp.ne.s32.totalorder %s47, %s49
    %p53 = scmp.eq.s32.totalorder %s13, 0
    %p54 = por %p52, %p53
    %p55 = scmp.ne.s32.totalorder %s47, %s49
    %p56 = scmp.eq.s32.totalorder %s18, 1
    %p57 = por %p55, %p56
    %p58 = scmp.ne.s32.totalorder %s49, %s50
    %p59 = scmp.eq.s32.totalorder %s18, 0
    %p60 = por %p58, %p59
    %p61 = scmp.ne.s32.totalorder %s49, %s50
    %p62 = scmp.eq.s32.totalorder %s19, 1
    %p63 = por %p61, %p62
    %p65 = scmp.ne.s32.totalorder %s50, %s64
    %p66 = scmp.eq.s32.totalorder %s19, 0
    %p67 = por %p65, %p66
    %s69 = sadd.s32 %s68, 1
    %p72 = scmp.eq.s32.totalorder %s13, 1
    %p73 = scmp.ne.s32.totalorder %s68, %s70
    %p74 = scmp.eq.s32.totalorder %s13, 0
    %p75 = por %p73, %p74
    %p76 = scmp.ne.s32.totalorder %s68, %s70
    %p77 = scmp.eq.s32.totalorder %s18, 1
    %p78 = por %p76, %p77
    %p79 = scmp.ne.s32.totalorder %s70, %s71
    %p80 = scmp.eq.s32.totalorder %s18, 0
    %p81 = por %p79, %p80
    %p82 = scmp.ne.s32.totalorder %s70, %s71
    %p83 = scmp.eq.s32.totalorder %s19, 1
    %p84 = por %p82, %p83
    %p86 = scmp.ne.s32.totalorder %s71, %s85
    %p87 = scmp.eq.s32.totalorder %s19, 0
    %p88 = por %p86, %p87
    %s90 = sadd.s32 %s89, 1
    %p93 = scmp.eq.s32.totalorder %s13, 1
    %p94 = scmp.ne.s32.totalorder %s89, %s91
    %p95 = scmp.eq.s32.totalorder %s13, 0
    %p96 = por %p94, %p95
    %p97 = scmp.ne.s32.totalorder %s89, %s91
    %p98 = scmp.eq.s32.totalorder %s18, 1
    %p99 = por %p97, %p98
    %p100 = scmp.ne.s32.totalorder %s91, %s92
    %p101 = scmp.eq.s32.totalorder %s18, 0
    %p102 = por %p100, %p101
    %p103 = scmp.ne.s32.totalorder %s91, %s92
    %p104 = scmp.eq.s32.totalorder %s19, 1
    %p105 = por %p103, %p104
    %p107 = scmp.ne.s32.totalorder %s92, %s106
    %p108 = scmp.eq.s32.totalorder %s19, 0
    %p109 = por %p107, %p108
    %s111 = sadd.s32 %s110, 1
    %p114 = scmp.eq.s32.totalorder %s13, 1
    %p115 = scmp.ne.s32.totalorder %s110, %s112
    %p116 = scmp.eq.s32.totalorder %s13, 0
    %p117 = por %p115, %p116
    %p118 = scmp.ne.s32.totalorder %s110, %s112
    %p119 = scmp.eq.s32.totalorder %s18, 1
    %p120 = por %p118, %p119
    %p121 = scmp.ne.s32.totalorder %s112, %s113
    %p122 = scmp.eq.s32.totalorder %s18, 0
    %p123 = por %p121, %p122
    %p124 = scmp.ne.s32.totalorder %s112, %s113
    %p125 = scmp.eq.s32.totalorder %s19, 1
    %p126 = por %p124, %p125
    %p128 = scmp.ne.s32.totalorder %s113, %s127
    %p129 = scmp.eq.s32.totalorder %s19, 0
    %p130 = por %p128, %p129
    %s132 = sadd.s32 %s131, 1
    %p135 = scmp.eq.s32.totalorder %s13, 1
    %p136 = scmp.ne.s32.totalorder %s131, %s133
    %p137 = scmp.eq.s32.totalorder %s13, 0
    %p138 = por %p136, %p137
    %p139 = scmp.ne.s32.totalorder %s131, %s133
    %p140 = scmp.eq.s32.totalorder %s18, 1
    %p141 = por %p139, %p140
    %p142 = scmp.ne.s32.totalorder %s133, %s134
    %p143 = scmp.eq.s32.totalorder %s18, 0
    %p144 = por %p142, %p143
    %p145 = scmp.ne.s32.totalorder %s133, %s134
    %p146 = scmp.eq.s32.totalorder %s19, 1
    %p147 = por %p145, %p146
    %p149 = scmp.ne.s32.totalorder %s134, %s148
    %p150 = scmp.eq.s32.totalorder %s19, 0
    %p151 = por %p149, %p150
    %s153 = sadd.s32 %s152, 1
    %p156 = scmp.eq.s32.totalorder %s13, 1
    %p157 = scmp.ne.s32.totalorder %s152, %s154
    %p158 = scmp.eq.s32.totalorder %s13, 0
    %p159 = por %p157, %p158
    %p160 = scmp.ne.s32.totalorder %s152, %s154
    %p161 = scmp.eq.s32.totalorder %s18, 1
    %p162 = por %p160, %p161
    %p163 = scmp.ne.s32.totalorder %s154, %s155
    %p164 = scmp.eq.s32.totalorder %s18, 0
    %p165 = por %p163, %p164
    %p166 = scmp.ne.s32.totalorder %s154, %s155
    %p167 = scmp.eq.s32.totalorder %s19, 1
    %p168 = por %p166, %p167
    %p170 = scmp.ne.s32.totalorder %s155, %s169
    %p171 = scmp.eq.s32.totalorder %s19, 0
    %p172 = por %p170, %p171
    %s173 = ssub.s32 %s13, %s20
    %p174 = scmp.eq.s32.totalorder %s173, 0
    %s176 = sadd.s32 %s175, 1
    %s177 = scalar_select %p174, %s175, %s176
    %p180 = pneg %p174
    %p181 = scmp.eq.s32.totalorder %s13, 1
    %p182 = por %p180, %p181
    %p183 = scmp.ne.s32.totalorder %s175, %s178
    %p184 = scmp.eq.s32.totalorder %s13, 0
    %p185 = por %p183, %p184
    %p186 = scmp.ne.s32.totalorder %s175, %s178
    %p187 = scmp.eq.s32.totalorder %s18, 1
    %p188 = por %p186, %p187
    %p189 = scmp.ne.s32.totalorder %s178, %s179
    %p190 = scmp.eq.s32.totalorder %s18, 0
    %p191 = por %p189, %p190
    %p192 = scmp.ne.s32.totalorder %s178, %s179
    %p193 = scmp.eq.s32.totalorder %s19, 1
    %p194 = por %p192, %p193
    %p196 = scmp.ne.s32.totalorder %s179, %s195
    %p197 = scmp.eq.s32.totalorder %s19, 0
    %p198 = por %p196, %p197
    %p199 = scmp.le.s32.totalorder 1, %s13
    %p200 = scmp.lt.s32.totalorder %s13, 3
    %p201 = pnand %p199, %p200
    %p202 = pneg %p201
    // Predicated region
    $region9: #{down_forward.1} parent=5 // pred_check
      _
    $region10: #{down_forward.1} parent=5 // pred_check_branch
      %204 = sbr.rel (%p201) target = $region12
    $region11: #{down_forward.1} parent=5 // pred_region
      %s205 = ssub.s32 %s13, 1
      // Predicated region
      $region13: #{down_forward.1} parent=11 // pred_check
        %p206 = pneg %p60
      $region14: #{down_forward.1} parent=11 // pred_check_branch
        %208 = sbr.rel (%p206) target = $region16
      $region15: #{down_forward.1} parent=11 // pred_region
        _
      $region16: #{down_forward.1} parent=11 // pred_fallthru
        _
      // Predicated region
      $region17: #{down_forward.1} parent=11 // pred_check
        %p209 = pneg %p81
      $region18: #{down_forward.1} parent=11 // pred_check_branch
        %211 = sbr.rel (%p209) target = $region20
      $region19: #{down_forward.1} parent=11 // pred_region
        _
      $region20: #{down_forward.1} parent=11 // pred_fallthru
        _
      // Predicated region
      $region21: #{down_forward.1} parent=11 // pred_check
        %p212 = pneg %p102
      $region22: #{down_forward.1} parent=11 // pred_check_branch
        %214 = sbr.rel (%p212) target = $region24
      $region23: #{down_forward.1} parent=11 // pred_region
        _
      $region24: #{down_forward.1} parent=11 // pred_fallthru
        _
      // Predicated region
      $region25: #{down_forward.1} parent=11 // pred_check
        %p215 = pneg %p123
      $region26: #{down_forward.1} parent=11 // pred_check_branch
        %217 = sbr.rel (%p215) target = $region28
      $region27: #{down_forward.1} parent=11 // pred_region
        _
      $region28: #{down_forward.1} parent=11 // pred_fallthru
        _
      // Predicated region
      $region29: #{down_forward.1} parent=11 // pred_check
        %p218 = pneg %p144
      $region30: #{down_forward.1} parent=11 // pred_check_branch
        %220 = sbr.rel (%p218) target = $region32
      $region31: #{down_forward.1} parent=11 // pred_region
        _
      $region32: #{down_forward.1} parent=11 // pred_fallthru
        _
      // Predicated region
      $region33: #{down_forward.1} parent=11 // pred_check
        %p221 = pneg %p165
      $region34: #{down_forward.1} parent=11 // pred_check_branch
        %223 = sbr.rel (%p221) target = $region36
      $region35: #{down_forward.1} parent=11 // pred_region
        _
      $region36: #{down_forward.1} parent=11 // pred_fallthru
        _
    $region12: #{down_forward.1} parent=5 // pred_fallthru
      _
    %p224 = scmp.lt.s32.totalorder %s13, 2
    // Predicated region
    $region37: #{down_forward.1} parent=5 // pred_check
      %p225 = pneg %p224
    $region38: #{down_forward.1} parent=5 // pred_check_branch
      %227 = sbr.rel (%p225) target = $region40
    $region39: #{down_forward.1} parent=5 // pred_region
      // Predicated region
      $region41: #{down_forward.1} parent=39 // pred_check
        %p228 = pneg %p33
      $region42: #{down_forward.1} parent=39 // pred_check_branch
        %230 = sbr.rel (%p228) target = $region44
      $region43: #{down_forward.1} parent=39 // pred_region
        %p231 = scmp.lt.s32.totalorder %s13, 1
        %s232 = scalar_select %p231, %s13, 1
        %s233 = smul.addr %s232, 8
        %s234 = smul.addr %s233, 8
        %s235 = scalar_lea.vmem %s0, %s234
      $region44: #{down_forward.1} parent=39 // pred_fallthru
        _
    $region40: #{down_forward.1} parent=5 // pred_fallthru
      _
    %p236 = scmp.le.s32.totalorder 1, %s13
    %p237 = scmp.lt.s32.totalorder %s13, 3
    %p238 = pnand %p236, %p237
    %p239 = pneg %p238
    // Predicated region
    $region45: #{down_forward.1} parent=5 // pred_check
      _
    $region46: #{down_forward.1} parent=5 // pred_check_branch
      %241 = sbr.rel (%p238) target = $region48
    $region47: #{down_forward.1} parent=5 // pred_region
      %s242 = ssub.s32 %s13, 1
      %p243 = scmp.lt.s32.totalorder %s18, 1
      %s244 = scalar_select %p243, %s18, 1
      %s245 = smul.addr %s244, 8
      %s246 = smul.addr %s245, 8
      %s247 = scalar_lea.vmem %s0, %s246
      %p248 = pneg %p39
      %p249 = pneg %p36
      %p250 = pneg %p60
      %p251 = pneg %p57
      %p252 = pneg %p81
      %p253 = pneg %p78
      %p254 = pneg %p102
      %p255 = pneg %p99
      %p256 = pneg %p123
      %p257 = pneg %p120
      %p258 = pneg %p144
      %p259 = pneg %p141
      %p260 = pneg %p165
      %p261 = pneg %p162
      %p262 = pneg %p191
      %p263 = pneg %p188
      %p264 = scmp.lt.s32.totalorder %s18, 1
      %s265 = scalar_select %p264, %s18, 1
      %s266 = smul.addr %s265, 8
      %s267 = scalar_lea.vmem %s7, %s266
      %p268 = scmp.lt.s32.totalorder %s18, 1
      %s269 = scalar_select %p268, %s18, 1
      %s270 = smul.addr %s269, 8
      %s271 = smul.addr %s270, 8
      %s272 = scalar_lea.vmem %s0, %s271
      %p273 = scmp.lt.s32.totalorder %s18, 1
      %s274 = scalar_select %p273, %s18, 1
      %s275 = smul.addr %s274, 8
      %s276 = scalar_lea.vmem %s7, %s275
      %v277 = vld [vmem:[%s272] sm:$0xff]
      %s278 = scalar_lea.vmem %s272, 16
      %v279 = vld [vmem:[%s278] sm:$0xff]
      %v280 = vmax.f32 %v277, %v279
      %282 = vrot.lane.b32.xlu0 %v277, 124
      %v283 = vpop.permute.xlu0 %282
      %v285 = vmax.f32 %v280, %v283
      %s286 = scalar_lea.vmem %s272, 32
      %v287 = vld [vmem:[%s286] sm:$0xff]
      %v288 = vmax.f32 %v285, %v287
      %s289 = scalar_lea.vmem %s272, 48
      %v290 = vld [vmem:[%s289] sm:$0xff]
      %v291 = vmax.f32 %v288, %v290
      %293 = vrot.lane.b32.xlu0 %v287, 124
      %v294 = vpop.permute.xlu0 %293
      %v296 = vmax.f32 %v291, %v294
      %v297 = vld [vmem:[%s272 + $0x1] sm:$0xff]
      %v298 = vmax.f32 %v296, %v297
      %v299 = vld [vmem:[%s278 + $0x1] sm:$0xff]
      %v300 = vmax.f32 %v298, %v299
      %302 = vrot.lane.b32.xlu0 %v297, 124
      %v303 = vpop.permute.xlu0 %302
      %v305 = vmax.f32 %v300, %v303
      %vm306 = vcmask 319488
      %307 = vst.msk [vmem:[#allocation2] sm:$0x1] %vm306, 0.0
      %308 = vst.msk [vmem:[#allocation2 + $0x9] sm:$0x1] %vm306, 0.0
      %vm309 = vcmask 31744
      %310 = vst.msk [vmem:[#allocation2] sm:$0xff] %vm309, 0.0
      %vm311 = vcmask 25600
      %312 = vst.msk [vmem:[#allocation2 + $0x8] sm:$0x3] %vm311, 0.0
      %vm313 = vcmask 326944
      %314 = vst.msk [vmem:[#allocation2] sm:$0xff] %vm313, 0.0
      %vm315 = vcmask 320800
      %316 = vst.msk [vmem:[#allocation2 + $0x8] sm:$0x3] %vm315, 0.0
      %318 = vrot.lane.b32.xlu0 %v305, 4
      %v319 = vpop.permute.xlu0 %318
      %vm321 = vcmask 293920
      %322 = vst.msk [vmem:[#allocation2 + $0x1] sm:$0xff] %vm321, %v319
      %v323 = vld [vmem:[#allocation2] sm:$0xff]
      %v324 = vld [vmem:[%s1] sm:$0xff]
      %v325 = vld [vmem:[%s1 + $0x8] sm:$0xff]
      %v326 = vld [vmem:[%s1 + $0x10] sm:$0xff]
      %v327 = vld [vmem:[%s1 + $0x18] sm:$0xff]
      %v328 = vld [vmem:[%s1 + $0x20] sm:$0xff]
      %v329 = vld [vmem:[#allocation2 + $0x1] sm:$0xff]
      %s330 = scalar_lea.vmem %s1, 40
      %v331 = vld [vmem:[%s330] sm:$0xff]
      %v332 = vld [vmem:[%s330 + $0x8] sm:$0xff]
      %v333 = vld [vmem:[%s330 + $0x10] sm:$0xff]
      %v334 = vld [vmem:[%s330 + $0x18] sm:$0xff]
      %v335 = vld [vmem:[%s330 + $0x20] sm:$0xff]
      %vm336 = vcmask 326656
      %v338 = vsel %vm336, %v329, 0
      %340 = vmatprep.subr.mxu0 0.0
      %341 = vmatpush1.msra.mxu0 %v331
      %342 = vmatprep.subr.mxu0 0.0
      %343 = vmatpush1.msra.mxu0 %v332
      %344 = vmatprep.subr.mxu0 0.0
      %345 = vmatpush1.msra.mxu0 %v333
      %346 = vmatprep.subr.mxu0 0.0
      %347 = vmatpush1.msra.mxu0 %v334
      %348 = vmatprep.subr.mxu0 0.0
      %349 = vmatpush1.msra.mxu0 %v335
      %350 = vmatprep.subr.mxu0 0.0
      %351 = vmatpush1.msra.mxu0 0.0
      %352 = vmatprep.subr.mxu0 0.0
      %353 = vmatpush1.msra.mxu0 0.0
      %354 = vmatprep.subr.mxu0 0.0
      %355 = vmatpush1.msra.mxu0 0.0
      %356 = vmatprep.subr.mxu0 0.0
      %357 = vmatpush1.msra.mxu0 0.0
      %358 = vmatprep.subr.mxu0 0.0
      %359 = vmatpush1.msra.mxu0 0.0
      %360 = vmatprep.subr.mxu0 0.0
      %361 = vmatpush1.msra.mxu0 0.0
      %362 = vmatprep.subr.mxu0 0.0
      %363 = vmatpush1.msra.mxu0 0.0
      %364 = vmatprep.subr.mxu0 0.0
      %365 = vmatpush1.msra.mxu0 0.0
      %366 = vmatprep.subr.mxu0 0.0
      %367 = vmatpush1.msra.mxu0 0.0
      %368 = vmatprep.subr.mxu0 0.0
      %369 = vmatpush1.msra.mxu0 0.0
      %370 = vmatprep.subr.mxu0 0.0
      %371 = vmatpush1.msra.mxu0 0.0
      %372 = vmatprep.subr.mxu0 0.0
      %373 = vmatpush1.msra.mxu0 0.0
      %374 = vmatprep.subr.mxu0 0.0
      %375 = vmatpush1.msra.mxu0 0.0
      %376 = vmatprep.subr.mxu0 0.0
      %377 = vmatpush1.msra.mxu0 0.0
      %378 = vmatprep.subr.mxu0 0.0
      %379 = vmatpush1.msra.mxu0 0.0
      %380 = vmatprep.subr.mxu0 0.0
      %381 = vmatpush1.msra.mxu0 0.0
      %382 = vmatprep.subr.mxu0 0.0
      %383 = vmatpush1.msra.mxu0 0.0
      %384 = vmatprep.subr.mxu0 0.0
      %385 = vmatpush1.msra.mxu0 0.0
      %386 = vmatprep.subr.mxu0 0.0
      %387 = vmatpush1.msra.mxu0 0.0
      %388 = vmatprep.subr.mxu0 0.0
      %389 = vmatpush1.msra.mxu0 0.0
      %390 = vmatprep.subr.mxu0 0.0
      %391 = vmatpush1.msra.mxu0 0.0
      %392 = vmatprep.subr.mxu0 0.0
      %393 = vmatpush1.msra.mxu0 0.0
      %394 = vmatprep.subr.mxu0 0.0
      %395 = vmatpush1.msra.mxu0 0.0
      %396 = vmatprep.subr.mxu0 0.0
      %397 = vmatpush1.msra.mxu0 0.0
      %398 = vmatprep.subr.mxu0 0.0
      %399 = vmatpush1.msra.mxu0 0.0
      %400 = vmatprep.subr.mxu0 0.0
      %401 = vmatpush1.msra.mxu0 0.0
      %402 = vmatprep.subr.mxu0 0.0
      %403 = vmatpush1.msra.mxu0 0.0
      %404 = vmatprep.mubr.f32.mxu0 0.0
      %405 = vmatmul.mubr.f32.gmra.mrb[0].mxu0 %v338
      %v406 = vpop.f32.mrb[0].mxu0
      %v407 = vadd.f32 0.0, %v406
      %v408 = vpop.f32.mrb[0].mxu0
      %409 = vdwg.mxu0
      %v411 = vsel %vm336, %v323, 0
      %413 = vmatprep.subr.mxu0 0.0
      %414 = vmatpush1.msra.mxu0 %v324
      %415 = vmatprep.subr.mxu0 0.0
      %416 = vmatpush1.msra.mxu0 %v325
      %417 = vmatprep.subr.mxu0 0.0
      %418 = vmatpush1.msra.mxu0 %v326
      %419 = vmatprep.subr.mxu0 0.0
      %420 = vmatpush1.msra.mxu0 %v327
      %421 = vmatprep.subr.mxu0 0.0
      %422 = vmatpush1.msra.mxu0 %v328
      %423 = vmatprep.subr.mxu0 0.0
      %424 = vmatpush1.msra.mxu0 0.0
      %425 = vmatprep.subr.mxu0 0.0
      %426 = vmatpush1.msra.mxu0 0.0
      %427 = vmatprep.subr.mxu0 0.0
      %428 = vmatpush1.msra.mxu0 0.0
      %429 = vmatprep.subr.mxu0 0.0
      %430 = vmatpush1.msra.mxu0 0.0
      %431 = vmatprep.subr.mxu0 0.0
      %432 = vmatpush1.msra.mxu0 0.0
      %433 = vmatprep.subr.mxu0 0.0
      %434 = vmatpush1.msra.mxu0 0.0
      %435 = vmatprep.subr.mxu0 0.0
      %436 = vmatpush1.msra.mxu0 0.0
      %437 = vmatprep.subr.mxu0 0.0
      %438 = vmatpush1.msra.mxu0 0.0
      %439 = vmatprep.subr.mxu0 0.0
      %440 = vmatpush1.msra.mxu0 0.0
      %441 = vmatprep.subr.mxu0 0.0
      %442 = vmatpush1.msra.mxu0 0.0
      %443 = vmatprep.subr.mxu0 0.0
      %444 = vmatpush1.msra.mxu0 0.0
      %445 = vmatprep.subr.mxu0 0.0
      %446 = vmatpush1.msra.mxu0 0.0
      %447 = vmatprep.subr.mxu0 0.0
      %448 = vmatpush1.msra.mxu0 0.0
      %449 = vmatprep.subr.mxu0 0.0
      %450 = vmatpush1.msra.mxu0 0.0
      %451 = vmatprep.subr.mxu0 0.0
      %452 = vmatpush1.msra.mxu0 0.0
      %453 = vmatprep.subr.mxu0 0.0
      %454 = vmatpush1.msra.mxu0 0.0
      %455 = vmatprep.subr.mxu0 0.0
      %456 = vmatpush1.msra.mxu0 0.0
      %457 = vmatprep.subr.mxu0 0.0
      %458 = vmatpush1.msra.mxu0 0.0
      %459 = vmatprep.subr.mxu0 0.0
      %460 = vmatpush1.msra.mxu0 0.0
      %461 = vmatprep.subr.mxu0 0.0
      %462 = vmatpush1.msra.mxu0 0.0
      %463 = vmatprep.subr.mxu0 0.0
      %464 = vmatpush1.msra.mxu0 0.0
      %465 = vmatprep.subr.mxu0 0.0
      %466 = vmatpush1.msra.mxu0 0.0
      %467 = vmatprep.subr.mxu0 0.0
      %468 = vmatpush1.msra.mxu0 0.0
      %469 = vmatprep.subr.mxu0 0.0
      %470 = vmatpush1.msra.mxu0 0.0
      %471 = vmatprep.subr.mxu0 0.0
      %472 = vmatpush1.msra.mxu0 0.0
      %473 = vmatprep.subr.mxu0 0.0
      %474 = vmatpush1.msra.mxu0 0.0
      %475 = vmatprep.subr.mxu0 0.0
      %476 = vmatpush1.msra.mxu0 0.0
      %477 = vmatprep.mubr.f32.mxu0 0.0
      %478 = vmatmul.mubr.f32.gmra.mrb[0].mxu0 %v411
      %v479 = vpop.f32.mrb[0].mxu0
      %v480 = vadd.f32 %v407, %v479
      %v481 = vpop.f32.mrb[0].mxu0
      %482 = vdwg.mxu0
      %v483 = vld [vmem:[#allocation2 + $0x2] sm:$0xff]
      %s484 = scalar_lea.vmem %s1, 80
      %v485 = vld [vmem:[%s484] sm:$0xff]
      %v486 = vld [vmem:[%s484 + $0x8] sm:$0xff]
      %v487 = vld [vmem:[%s484 + $0x10] sm:$0xff]
      %v488 = vld [vmem:[%s484 + $0x18] sm:$0xff]
      %v489 = vld [vmem:[%s484 + $0x20] sm:$0xff]
      %v491 = vsel %vm336, %v483, 0
      %493 = vmatprep.subr.mxu0 0.0
      %494 = vmatpush1.msra.mxu0 %v485
      %495 = vmatprep.subr.mxu0 0.0
      %496 = vmatpush1.msra.mxu0 %v486
      %497 = vmatprep.subr.mxu0 0.0
      %498 = vmatpush1.msra.mxu0 %v487
      %499 = vmatprep.subr.mxu0 0.0
      %500 = vmatpush1.msra.mxu0 %v488
      %501 = vmatprep.subr.mxu0 0.0
      %502 = vmatpush1.msra.mxu0 %v489
      %503 = vmatprep.subr.mxu0 0.0
      %504 = vmatpush1.msra.mxu0 0.0
      %505 = vmatprep.subr.mxu0 0.0
      %506 = vmatpush1.msra.mxu0 0.0
      %507 = vmatprep.subr.mxu0 0.0
      %508 = vmatpush1.msra.mxu0 0.0
      %509 = vmatprep.subr.mxu0 0.0
      %510 = vmatpush1.msra.mxu0 0.0
      %511 = vmatprep.subr.mxu0 0.0
      %512 = vmatpush1.msra.mxu0 0.0
      %513 = vmatprep.subr.mxu0 0.0
      %514 = vmatpush1.msra.mxu0 0.0
      %515 = vmatprep.subr.mxu0 0.0
      %516 = vmatpush1.msra.mxu0 0.0
      %517 = vmatprep.subr.mxu0 0.0
      %518 = vmatpush1.msra.mxu0 0.0
      %519 = vmatprep.subr.mxu0 0.0
      %520 = vmatpush1.msra.mxu0 0.0
      %521 = vmatprep.subr.mxu0 0.0
      %522 = vmatpush1.msra.mxu0 0.0
      %523 = vmatprep.subr.mxu0 0.0
      %524 = vmatpush1.msra.mxu0 0.0
      %525 = vmatprep.subr.mxu0 0.0
      %526 = vmatpush1.msra.mxu0 0.0
      %527 = vmatprep.subr.mxu0 0.0
      %528 = vmatpush1.msra.mxu0 0.0
      %529 = vmatprep.subr.mxu0 0.0
      %530 = vmatpush1.msra.mxu0 0.0
      %531 = vmatprep.subr.mxu0 0.0
      %532 = vmatpush1.msra.mxu0 0.0
      %533 = vmatprep.subr.mxu0 0.0
      %534 = vmatpush1.msra.mxu0 0.0
      %535 = vmatprep.subr.mxu0 0.0
      %536 = vmatpush1.msra.mxu0 0.0
      %537 = vmatprep.subr.mxu0 0.0
      %538 = vmatpush1.msra.mxu0 0.0
      %539 = vmatprep.subr.mxu0 0.0
      %540 = vmatpush1.msra.mxu0 0.0
      %541 = vmatprep.subr.mxu0 0.0
      %542 = vmatpush1.msra.mxu0 0.0
      %543 = vmatprep.subr.mxu0 0.0
      %544 = vmatpush1.msra.mxu0 0.0
      %545 = vmatprep.subr.mxu0 0.0
      %546 = vmatpush1.msra.mxu0 0.0
      %547 = vmatprep.subr.mxu0 0.0
      %548 = vmatpush1.msra.mxu0 0.0
      %549 = vmatprep.subr.mxu0 0.0
      %550 = vmatpush1.msra.mxu0 0.0
      %551 = vmatprep.subr.mxu0 0.0
      %552 = vmatpush1.msra.mxu0 0.0
      %553 = vmatprep.subr.mxu0 0.0
      %554 = vmatpush1.msra.mxu0 0.0
      %555 = vmatprep.subr.mxu0 0.0
      %556 = vmatpush1.msra.mxu0 0.0
      %557 = vmatprep.mubr.f32.mxu0 0.0
      %558 = vmatmul.mubr.f32.gmra.mrb[0].mxu0 %v491
      %v559 = vpop.f32.mrb[0].mxu0
      %v560 = vadd.f32 0.0, %v559
      %v561 = vpop.f32.mrb[0].mxu0
      %562 = vdwg.mxu0
      %v563 = vadd.f32 %v480, %v560
      %v564 = vld [vmem:[%s2] sm:$0x1]
      %v566 = vlaneseq
      %v567 = vshrl.u32 %v566, 7
      %v568 = vsub.s32 0, %v567
      %v569 = vrot.slane %v564, %v568
      %v571 = vadd.f32 %v563, %v569
      %v572 = vmin.f32 %v571, 25.0
      %v573 = vmul.f32 %v572, 1.442695
      %v574 = vpow.pop %v573
      %v575 = vadd.f32 %v574, 2.0
      %v576 = vmul.f32 %v574, %v575
      %v577 = vmul.f32 %v571, %v576
      %v578 = vadd.f32 %v576, 2.0
      %v579 = vrcp.pop %v578
      %v580 = vmul.f32 %v577, %v579
      %vm581 = vcmask 647168
      %582 = vst.msk [vmem:[#allocation3] sm:$0x1] %vm581, 0.0
      %583 = vst.msk [vmem:[#allocation3 + $0x9] sm:$0x1] %vm581, 0.0
      %vm584 = vcmask 64512
      %585 = vst.msk [vmem:[#allocation3] sm:$0xff] %vm584, 0.0
      %vm586 = vcmask 58368
      %587 = vst.msk [vmem:[#allocation3 + $0x8] sm:$0x3] %vm586, 0.0
      %vm588 = vcmask 654912
      %589 = vst.msk [vmem:[#allocation3] sm:$0xff] %vm588, 0.0
      %vm590 = vcmask 648768
      %591 = vst.msk [vmem:[#allocation3 + $0x8] sm:$0x3] %vm590, 0.0
      %593 = vrot.lane.b32.xlu0 %v580, 8
      %v594 = vpop.permute.xlu0 %593
      %vm596 = vcmask 588864
      %597 = vst.msk [vmem:[#allocation3 + $0x1] sm:$0xff] %vm596, %v594
      %v598 = vld [vmem:[#allocation3] sm:$0xff]
      %v599 = vld [vmem:[%s3] sm:$0xff]
      %v600 = vld [vmem:[%s3 + $0x8] sm:$0xff]
      %v601 = vld [vmem:[%s3 + $0x10] sm:$0xff]
      %v602 = vld [vmem:[%s3 + $0x18] sm:$0xff]
      %v603 = vld [vmem:[%s3 + $0x20] sm:$0xff]
      %v604 = vld [vmem:[%s3 + $0x28] sm:$0xff]
      %v605 = vld [vmem:[%s3 + $0x30] sm:$0xff]
      %v606 = vld [vmem:[%s3 + $0x38] sm:$0xff]
      %v607 = vld [vmem:[%s3 + $0x40] sm:$0xff]
      %v608 = vld [vmem:[%s3 + $0x48] sm:$0xff]
      %v609 = vld [vmem:[#allocation3 + $0x1] sm:$0xff]
      %s610 = scalar_lea.vmem %s3, 80
      %v611 = vld [vmem:[%s610] sm:$0xff]
      %v612 = vld [vmem:[%s610 + $0x8] sm:$0xff]
      %v613 = vld [vmem:[%s610 + $0x10] sm:$0xff]
      %v614 = vld [vmem:[%s610 + $0x18] sm:$0xff]
      %v615 = vld [vmem:[%s610 + $0x20] sm:$0xff]
      %v616 = vld [vmem:[%s610 + $0x28] sm:$0xff]
      %v617 = vld [vmem:[%s610 + $0x30] sm:$0xff]
      %v618 = vld [vmem:[%s610 + $0x38] sm:$0xff]
      %v619 = vld [vmem:[%s610 + $0x40] sm:$0xff]
      %v620 = vld [vmem:[%s610 + $0x48] sm:$0xff]
      %vm621 = vcmask 654336
      %v623 = vsel %vm621, %v609, 0
      %625 = vmatprep.subr.mxu0 0.0
      %626 = vmatpush1.msra.mxu0 %v611
      %627 = vmatprep.subr.mxu0 0.0
      %628 = vmatpush1.msra.mxu0 %v612
      %629 = vmatprep.subr.mxu0 0.0
      %630 = vmatpush1.msra.mxu0 %v613
      %631 = vmatprep.subr.mxu0 0.0
      %632 = vmatpush1.msra.mxu0 %v614
      %633 = vmatprep.subr.mxu0 0.0
      %634 = vmatpush1.msra.mxu0 %v615
      %635 = vmatprep.subr.mxu0 0.0
      %636 = vmatpush1.msra.mxu0 %v616
      %637 = vmatprep.subr.mxu0 0.0
      %638 = vmatpush1.msra.mxu0 %v617
      %639 = vmatprep.subr.mxu0 0.0
      %640 = vmatpush1.msra.mxu0 %v618
      %641 = vmatprep.subr.mxu0 0.0
      %642 = vmatpush1.msra.mxu0 %v619
      %643 = vmatprep.subr.mxu0 0.0
      %644 = vmatpush1.msra.mxu0 %v620
      %645 = vmatprep.subr.mxu0 0.0
      %646 = vmatpush1.msra.mxu0 0.0
      %647 = vmatprep.subr.mxu0 0.0
      %648 = vmatpush1.msra.mxu0 0.0
      %649 = vmatprep.subr.mxu0 0.0
      %650 = vmatpush1.msra.mxu0 0.0
      %651 = vmatprep.subr.mxu0 0.0
      %652 = vmatpush1.msra.mxu0 0.0
      %653 = vmatprep.subr.mxu0 0.0
      %654 = vmatpush1.msra.mxu0 0.0
      %655 = vmatprep.subr.mxu0 0.0
      %656 = vmatpush1.msra.mxu0 0.0
      %657 = vmatprep.subr.mxu0 0.0
      %658 = vmatpush1.msra.mxu0 0.0
      %659 = vmatprep.subr.mxu0 0.0
      %660 = vmatpush1.msra.mxu0 0.0
      %661 = vmatprep.subr.mxu0 0.0
      %662 = vmatpush1.msra.mxu0 0.0
      %663 = vmatprep.subr.mxu0 0.0
      %664 = vmatpush1.msra.mxu0 0.0
      %665 = vmatprep.subr.mxu0 0.0
      %666 = vmatpush1.msra.mxu0 0.0
      %667 = vmatprep.subr.mxu0 0.0
      %668 = vmatpush1.msra.mxu0 0.0
      %669 = vmatprep.subr.mxu0 0.0
      %670 = vmatpush1.msra.mxu0 0.0
      %671 = vmatprep.subr.mxu0 0.0
      %672 = vmatpush1.msra.mxu0 0.0
      %673 = vmatprep.subr.mxu0 0.0
      %674 = vmatpush1.msra.mxu0 0.0
      %675 = vmatprep.subr.mxu0 0.0
      %676 = vmatpush1.msra.mxu0 0.0
      %677 = vmatprep.subr.mxu0 0.0
      %678 = vmatpush1.msra.mxu0 0.0
      %679 = vmatprep.subr.mxu0 0.0
      %680 = vmatpush1.msra.mxu0 0.0
      %681 = vmatprep.subr.mxu0 0.0
      %682 = vmatpush1.msra.mxu0 0.0
      %683 = vmatprep.subr.mxu0 0.0
      %684 = vmatpush1.msra.mxu0 0.0
      %685 = vmatprep.subr.mxu0 0.0
      %686 = vmatpush1.msra.mxu0 0.0
      %687 = vmatprep.subr.mxu0 0.0
      %688 = vmatpush1.msra.mxu0 0.0
      %689 = vmatprep.mubr.f32.mxu0 0.0
      %690 = vmatmul.mubr.f32.gmra.mrb[0].mxu0 %v623
      %v691 = vpop.f32.mrb[0].mxu0
      %v692 = vadd.f32 0.0, %v691
      %v693 = vpop.f32.mrb[0].mxu0
      %694 = vdwg.mxu0
      %v696 = vsel %vm621, %v598, 0
      %698 = vmatprep.subr.mxu0 0.0
      %699 = vmatpush1.msra.mxu0 %v599
      %700 = vmatprep.subr.mxu0 0.0
      %701 = vmatpush1.msra.mxu0 %v600
      %702 = vmatprep.subr.mxu0 0.0
      %703 = vmatpush1.msra.mxu0 %v601
      %704 = vmatprep.subr.mxu0 0.0
      %705 = vmatpush1.msra.mxu0 %v602
      %706 = vmatprep.subr.mxu0 0.0
      %707 = vmatpush1.msra.mxu0 %v603
      %708 = vmatprep.subr.mxu0 0.0
      %709 = vmatpush1.msra.mxu0 %v604
      %710 = vmatprep.subr.mxu0 0.0
      %711 = vmatpush1.msra.mxu0 %v605
      %712 = vmatprep.subr.mxu0 0.0
      %713 = vmatpush1.msra.mxu0 %v606
      %714 = vmatprep.subr.mxu0 0.0
      %715 = vmatpush1.msra.mxu0 %v607
      %716 = vmatprep.subr.mxu0 0.0
      %717 = vmatpush1.msra.mxu0 %v608
      %718 = vmatprep.subr.mxu0 0.0
      %719 = vmatpush1.msra.mxu0 0.0
      %720 = vmatprep.subr.mxu0 0.0
      %721 = vmatpush1.msra.mxu0 0.0
      %722 = vmatprep.subr.mxu0 0.0
      %723 = vmatpush1.msra.mxu0 0.0
      %724 = vmatprep.subr.mxu0 0.0
      %725 = vmatpush1.msra.mxu0 0.0
      %726 = vmatprep.subr.mxu0 0.0
      %727 = vmatpush1.msra.mxu0 0.0
      %728 = vmatprep.subr.mxu0 0.0
      %729 = vmatpush1.msra.mxu0 0.0
      %730 = vmatprep.subr.mxu0 0.0
      %731 = vmatpush1.msra.mxu0 0.0
      %732 = vmatprep.subr.mxu0 0.0
      %733 = vmatpush1.msra.mxu0 0.0
      %734 = vmatprep.subr.mxu0 0.0
      %735 = vmatpush1.msra.mxu0 0.0
      %736 = vmatprep.subr.mxu0 0.0
      %737 = vmatpush1.msra.mxu0 0.0
      %738 = vmatprep.subr.mxu0 0.0
      %739 = vmatpush1.msra.mxu0 0.0
      %740 = vmatprep.subr.mxu0 0.0
      %741 = vmatpush1.msra.mxu0 0.0
      %742 = vmatprep.subr.mxu0 0.0
      %743 = vmatpush1.msra.mxu0 0.0
      %744 = vmatprep.subr.mxu0 0.0
      %745 = vmatpush1.msra.mxu0 0.0
      %746 = vmatprep.subr.mxu0 0.0
      %747 = vmatpush1.msra.mxu0 0.0
      %748 = vmatprep.subr.mxu0 0.0
      %749 = vmatpush1.msra.mxu0 0.0
      %750 = vmatprep.subr.mxu0 0.0
      %751 = vmatpush1.msra.mxu0 0.0
      %752 = vmatprep.subr.mxu0 0.0
      %753 = vmatpush1.msra.mxu0 0.0
      %754 = vmatprep.subr.mxu0 0.0
      %755 = vmatpush1.msra.mxu0 0.0
      %756 = vmatprep.subr.mxu0 0.0
      %757 = vmatpush1.msra.mxu0 0.0
      %758 = vmatprep.subr.mxu0 0.0
      %759 = vmatpush1.msra.mxu0 0.0
      %760 = vmatprep.subr.mxu0 0.0
      %761 = vmatpush1.msra.mxu0 0.0
      %762 = vmatprep.mubr.f32.mxu0 0.0
      %763 = vmatmul.mubr.f32.gmra.mrb[0].mxu0 %v696
      %v764 = vpop.f32.mrb[0].mxu0
      %v765 = vadd.f32 %v692, %v764
      %v766 = vpop.f32.mrb[0].mxu0
      %767 = vdwg.mxu0
      %v768 = vld [vmem:[#allocation3 + $0x2] sm:$0xff]
      %s769 = scalar_lea.vmem %s3, 160
      %v770 = vld [vmem:[%s769] sm:$0xff]
      %v771 = vld [vmem:[%s769 + $0x8] sm:$0xff]
      %v772 = vld [vmem:[%s769 + $0x10] sm:$0xff]
      %v773 = vld [vmem:[%s769 + $0x18] sm:$0xff]
      %v774 = vld [vmem:[%s769 + $0x20] sm:$0xff]
      %v775 = vld [vmem:[%s769 + $0x28] sm:$0xff]
      %v776 = vld [vmem:[%s769 + $0x30] sm:$0xff]
      %v777 = vld [vmem:[%s769 + $0x38] sm:$0xff]
      %v778 = vld [vmem:[%s769 + $0x40] sm:$0xff]
      %v779 = vld [vmem:[%s769 + $0x48] sm:$0xff]
      %v781 = vsel %vm621, %v768, 0
      %783 = vmatprep.subr.mxu0 0.0
      %784 = vmatpush1.msra.mxu0 %v770
      %785 = vmatprep.subr.mxu0 0.0
      %786 = vmatpush1.msra.mxu0 %v771
      %787 = vmatprep.subr.mxu0 0.0
      %788 = vmatpush1.msra.mxu0 %v772
      %789 = vmatprep.subr.mxu0 0.0
      %790 = vmatpush1.msra.mxu0 %v773
      %791 = vmatprep.subr.mxu0 0.0
      %792 = vmatpush1.msra.mxu0 %v774
      %793 = vmatprep.subr.mxu0 0.0
      %794 = vmatpush1.msra.mxu0 %v775
      %795 = vmatprep.subr.mxu0 0.0
      %796 = vmatpush1.msra.mxu0 %v776
      %797 = vmatprep.subr.mxu0 0.0
      %798 = vmatpush1.msra.mxu0 %v777
      %799 = vmatprep.subr.mxu0 0.0
      %800 = vmatpush1.msra.mxu0 %v778
      %801 = vmatprep.subr.mxu0 0.0
      %802 = vmatpush1.msra.mxu0 %v779
      %803 = vmatprep.subr.mxu0 0.0
      %804 = vmatpush1.msra.mxu0 0.0
      %805 = vmatprep.subr.mxu0 0.0
      %806 = vmatpush1.msra.mxu0 0.0
      %807 = vmatprep.subr.mxu0 0.0
      %808 = vmatpush1.msra.mxu0 0.0
      %809 = vmatprep.subr.mxu0 0.0
      %810 = vmatpush1.msra.mxu0 0.0
      %811 = vmatprep.subr.mxu0 0.0
      %812 = vmatpush1.msra.mxu0 0.0
      %813 = vmatprep.subr.mxu0 0.0
      %814 = vmatpush1.msra.mxu0 0.0
      %815 = vmatprep.subr.mxu0 0.0
      %816 = vmatpush1.msra.mxu0 0.0
      %817 = vmatprep.subr.mxu0 0.0
      %818 = vmatpush1.msra.mxu0 0.0
      %819 = vmatprep.subr.mxu0 0.0
      %820 = vmatpush1.msra.mxu0 0.0
      %821 = vmatprep.subr.mxu0 0.0
      %822 = vmatpush1.msra.mxu0 0.0
      %823 = vmatprep.subr.mxu0 0.0
      %824 = vmatpush1.msra.mxu0 0.0
      %825 = vmatprep.subr.mxu0 0.0
      %826 = vmatpush1.msra.mxu0 0.0
      %827 = vmatprep.subr.mxu0 0.0
      %828 = vmatpush1.msra.mxu0 0.0
      %829 = vmatprep.subr.mxu0 0.0
      %830 = vmatpush1.msra.mxu0 0.0
      %831 = vmatprep.subr.mxu0 0.0
      %832 = vmatpush1.msra.mxu0 0.0
      %833 = vmatprep.subr.mxu0 0.0
      %834 = vmatpush1.msra.mxu0 0.0
      %835 = vmatprep.subr.mxu0 0.0
      %836 = vmatpush1.msra.mxu0 0.0
      %837 = vmatprep.subr.mxu0 0.0
      %838 = vmatpush1.msra.mxu0 0.0
      %839 = vmatprep.subr.mxu0 0.0
      %840 = vmatpush1.msra.mxu0 0.0
      %841 = vmatprep.subr.mxu0 0.0
      %842 = vmatpush1.msra.mxu0 0.0
      %843 = vmatprep.subr.mxu0 0.0
      %844 = vmatpush1.msra.mxu0 0.0
      %845 = vmatprep.subr.mxu0 0.0
      %846 = vmatpush1.msra.mxu0 0.0
      %847 = vmatprep.mubr.f32.mxu0 0.0
      %848 = vmatmul.mubr.f32.gmra.mrb[0].mxu0 %v781
      %v849 = vpop.f32.mrb[0].mxu0
      %v850 = vadd.f32 0.0, %v849
      %v851 = vpop.f32.mrb[0].mxu0
      %852 = vdwg.mxu0
      %v853 = vadd.f32 %v765, %v850
      %v854 = vld [vmem:[%s4] sm:$0x1]
      %v856 = vlaneseq
      %v857 = vshrl.u32 %v856, 7
      %v858 = vsub.s32 0, %v857
      %v859 = vrot.slane %v854, %v858
      %v861 = vadd.f32 %v853, %v859
      %v862 = vmin.f32 %v861, 25.0
      %v863 = vmul.f32 %v862, 1.442695
      %v864 = vpow.pop %v863
      %v865 = vadd.f32 %v864, 2.0
      %v866 = vmul.f32 %v864, %v865
      %v867 = vmul.f32 %v861, %v866
      %v868 = vadd.f32 %v866, 2.0
      %v869 = vrcp.pop %v868
      %v870 = vmul.f32 %v867, %v869
      %872 = vrot.lane.b32.xlu0 %v870, 8
      %v873 = vpop.permute.xlu0 %872
      %875 = vst.msk [vmem:[#allocation3 + $0x1] sm:$0xff] %vm596, %v873
      %v876 = vld [vmem:[#allocation3] sm:$0xff]
      %v877 = vld [vmem:[%s5] sm:$0xff]
      %v878 = vld [vmem:[%s5 + $0x8] sm:$0xff]
      %v879 = vld [vmem:[%s5 + $0x10] sm:$0xff]
      %v880 = vld [vmem:[%s5 + $0x18] sm:$0xff]
      %v881 = vld [vmem:[%s5 + $0x20] sm:$0xff]
      %v882 = vld [vmem:[%s5 + $0x28] sm:$0xff]
      %v883 = vld [vmem:[%s5 + $0x30] sm:$0xff]
      %v884 = vld [vmem:[%s5 + $0x38] sm:$0xff]
      %v885 = vld [vmem:[%s5 + $0x40] sm:$0xff]
      %v886 = vld [vmem:[%s5 + $0x48] sm:$0xff]
      %v887 = vld [vmem:[#allocation3 + $0x1] sm:$0xff]
      %s888 = scalar_lea.vmem %s5, 80
      %v889 = vld [vmem:[%s888] sm:$0xff]
      %v890 = vld [vmem:[%s888 + $0x8] sm:$0xff]
      %v891 = vld [vmem:[%s888 + $0x10] sm:$0xff]
      %v892 = vld [vmem:[%s888 + $0x18] sm:$0xff]
      %v893 = vld [vmem:[%s888 + $0x20] sm:$0xff]
      %v894 = vld [vmem:[%s888 + $0x28] sm:$0xff]
      %v895 = vld [vmem:[%s888 + $0x30] sm:$0xff]
      %v896 = vld [vmem:[%s888 + $0x38] sm:$0xff]
      %v897 = vld [vmem:[%s888 + $0x40] sm:$0xff]
      %v898 = vld [vmem:[%s888 + $0x48] sm:$0xff]
      %v900 = vsel %vm621, %v887, 0
      %902 = vmatprep.subr.mxu0 0.0
      %903 = vmatpush1.msra.mxu0 %v889
      %904 = vmatprep.subr.mxu0 0.0
      %905 = vmatpush1.msra.mxu0 %v890
      %906 = vmatprep.subr.mxu0 0.0
      %907 = vmatpush1.msra.mxu0 %v891
      %908 = vmatprep.subr.mxu0 0.0
      %909 = vmatpush1.msra.mxu0 %v892
      %910 = vmatprep.subr.mxu0 0.0
      %911 = vmatpush1.msra.mxu0 %v893
      %912 = vmatprep.subr.mxu0 0.0
      %913 = vmatpush1.msra.mxu0 %v894
      %914 = vmatprep.subr.mxu0 0.0
      %915 = vmatpush1.msra.mxu0 %v895
      %916 = vmatprep.subr.mxu0 0.0
      %917 = vmatpush1.msra.mxu0 %v896
      %918 = vmatprep.subr.mxu0 0.0
      %919 = vmatpush1.msra.mxu0 %v897
      %920 = vmatprep.subr.mxu0 0.0
      %921 = vmatpush1.msra.mxu0 %v898
      %922 = vmatprep.subr.mxu0 0.0
      %923 = vmatpush1.msra.mxu0 0.0
      %924 = vmatprep.subr.mxu0 0.0
      %925 = vmatpush1.msra.mxu0 0.0
      %926 = vmatprep.subr.mxu0 0.0
      %927 = vmatpush1.msra.mxu0 0.0
      %928 = vmatprep.subr.mxu0 0.0
      %929 = vmatpush1.msra.mxu0 0.0
      %930 = vmatprep.subr.mxu0 0.0
      %931 = vmatpush1.msra.mxu0 0.0
      %932 = vmatprep.subr.mxu0 0.0
      %933 = vmatpush1.msra.mxu0 0.0
      %934 = vmatprep.subr.mxu0 0.0
      %935 = vmatpush1.msra.mxu0 0.0
      %936 = vmatprep.subr.mxu0 0.0
      %937 = vmatpush1.msra.mxu0 0.0
      %938 = vmatprep.subr.mxu0 0.0
      %939 = vmatpush1.msra.mxu0 0.0
      %940 = vmatprep.subr.mxu0 0.0
      %941 = vmatpush1.msra.mxu0 0.0
      %942 = vmatprep.subr.mxu0 0.0
      %943 = vmatpush1.msra.mxu0 0.0
      %944 = vmatprep.subr.mxu0 0.0
      %945 = vmatpush1.msra.mxu0 0.0
      %946 = vmatprep.subr.mxu0 0.0
      %947 = vmatpush1.msra.mxu0 0.0
      %948 = vmatprep.subr.mxu0 0.0
      %949 = vmatpush1.msra.mxu0 0.0
      %950 = vmatprep.subr.mxu0 0.0
      %951 = vmatpush1.msra.mxu0 0.0
      %952 = vmatprep.subr.mxu0 0.0
      %953 = vmatpush1.msra.mxu0 0.0
      %954 = vmatprep.subr.mxu0 0.0
      %955 = vmatpush1.msra.mxu0 0.0
      %956 = vmatprep.subr.mxu0 0.0
      %957 = vmatpush1.msra.mxu0 0.0
      %958 = vmatprep.subr.mxu0 0.0
      %959 = vmatpush1.msra.mxu0 0.0
      %960 = vmatprep.subr.mxu0 0.0
      %961 = vmatpush1.msra.mxu0 0.0
      %962 = vmatprep.subr.mxu0 0.0
      %963 = vmatpush1.msra.mxu0 0.0
      %964 = vmatprep.subr.mxu0 0.0
      %965 = vmatpush1.msra.mxu0 0.0
      %966 = vmatprep.mubr.f32.mxu0 0.0
      %967 = vmatmul.mubr.f32.gmra.mrb[0].mxu0 %v900
      %v968 = vpop.f32.mrb[0].mxu0
      %v969 = vadd.f32 0.0, %v968
      %v970 = vpop.f32.mrb[0].mxu0
      %971 = vdwg.mxu0
      %v973 = vsel %vm621, %v876, 0
      %975 = vmatprep.subr.mxu0 0.0
      %976 = vmatpush1.msra.mxu0 %v877
      %977 = vmatprep.subr.mxu0 0.0
      %978 = vmatpush1.msra.mxu0 %v878
      %979 = vmatprep.subr.mxu0 0.0
      %980 = vmatpush1.msra.mxu0 %v879
      %981 = vmatprep.subr.mxu0 0.0
      %982 = vmatpush1.msra.mxu0 %v880
      %983 = vmatprep.subr.mxu0 0.0
      %984 = vmatpush1.msra.mxu0 %v881
      %985 = vmatprep.subr.mxu0 0.0
      %986 = vmatpush1.msra.mxu0 %v882
      %987 = vmatprep.subr.mxu0 0.0
      %988 = vmatpush1.msra.mxu0 %v883
      %989 = vmatprep.subr.mxu0 0.0
      %990 = vmatpush1.msra.mxu0 %v884
      %991 = vmatprep.subr.mxu0 0.0
      %992 = vmatpush1.msra.mxu0 %v885
      %993 = vmatprep.subr.mxu0 0.0
      %994 = vmatpush1.msra.mxu0 %v886
      %995 = vmatprep.subr.mxu0 0.0
      %996 = vmatpush1.msra.mxu0 0.0
      %997 = vmatprep.subr.mxu0 0.0
      %998 = vmatpush1.msra.mxu0 0.0
      %999 = vmatprep.subr.mxu0 0.0
      %1000 = vmatpush1.msra.mxu0 0.0
      %1001 = vmatprep.subr.mxu0 0.0
      %1002 = vmatpush1.msra.mxu0 0.0
      %1003 = vmatprep.subr.mxu0 0.0
      %1004 = vmatpush1.msra.mxu0 0.0
      %1005 = vmatprep.subr.mxu0 0.0
      %1006 = vmatpush1.msra.mxu0 0.0
      %1007 = vmatprep.subr.mxu0 0.0
      %1008 = vmatpush1.msra.mxu0 0.0
      %1009 = vmatprep.subr.mxu0 0.0
      %1010 = vmatpush1.msra.mxu0 0.0
      %1011 = vmatprep.subr.mxu0 0.0
      %1012 = vmatpush1.msra.mxu0 0.0
      %1013 = vmatprep.subr.mxu0 0.0
      %1014 = vmatpush1.msra.mxu0 0.0
      %1015 = vmatprep.subr.mxu0 0.0
      %1016 = vmatpush1.msra.mxu0 0.0
      %1017 = vmatprep.subr.mxu0 0.0
      %1018 = vmatpush1.msra.mxu0 0.0
      %1019 = vmatprep.subr.mxu0 0.0
      %1020 = vmatpush1.msra.mxu0 0.0
      %1021 = vmatprep.subr.mxu0 0.0
      %1022 = vmatpush1.msra.mxu0 0.0
      %1023 = vmatprep.subr.mxu0 0.0
      %1024 = vmatpush1.msra.mxu0 0.0
      %1025 = vmatprep.subr.mxu0 0.0
      %1026 = vmatpush1.msra.mxu0 0.0
      %1027 = vmatprep.subr.mxu0 0.0
      %1028 = vmatpush1.msra.mxu0 0.0
      %1029 = vmatprep.subr.mxu0 0.0
      %1030 = vmatpush1.msra.mxu0 0.0
      %1031 = vmatprep.subr.mxu0 0.0
      %1032 = vmatpush1.msra.mxu0 0.0
      %1033 = vmatprep.subr.mxu0 0.0
      %1034 = vmatpush1.msra.mxu0 0.0
      %1035 = vmatprep.subr.mxu0 0.0
      %1036 = vmatpush1.msra.mxu0 0.0
      %1037 = vmatprep.subr.mxu0 0.0
      %1038 = vmatpush1.msra.mxu0 0.0
      %1039 = vmatprep.mubr.f32.mxu0 0.0
      %1040 = vmatmul.mubr.f32.gmra.mrb[0].mxu0 %v973
      %v1041 = vpop.f32.mrb[0].mxu0
      %v1042 = vadd.f32 %v969, %v1041
      %v1043 = vpop.f32.mrb[0].mxu0
      %1044 = vdwg.mxu0
      %v1045 = vld [vmem:[#allocation3 + $0x2] sm:$0xff]
      %s1046 = scalar_lea.vmem %s5, 160
      %v1047 = vld [vmem:[%s1046] sm:$0xff]
      %v1048 = vld [vmem:[%s1046 + $0x8] sm:$0xff]
      %v1049 = vld [vmem:[%s1046 + $0x10] sm:$0xff]
      %v1050 = vld [vmem:[%s1046 + $0x18] sm:$0xff]
      %v1051 = vld [vmem:[%s1046 + $0x20] sm:$0xff]
      %v1052 = vld [vmem:[%s1046 + $0x28] sm:$0xff]
      %v1053 = vld [vmem:[%s1046 + $0x30] sm:$0xff]
      %v1054 = vld [vmem:[%s1046 + $0x38] sm:$0xff]
      %v1055 = vld [vmem:[%s1046 + $0x40] sm:$0xff]
      %v1056 = vld [vmem:[%s1046 + $0x48] sm:$0xff]
      %v1058 = vsel %vm621, %v1045, 0
      %1060 = vmatprep.subr.mxu0 0.0
      %1061 = vmatpush1.msra.mxu0 %v1047
      %1062 = vmatprep.subr.mxu0 0.0
      %1063 = vmatpush1.msra.mxu0 %v1048
      %1064 = vmatprep.subr.mxu0 0.0
      %1065 = vmatpush1.msra.mxu0 %v1049
      %1066 = vmatprep.subr.mxu0 0.0
      %1067 = vmatpush1.msra.mxu0 %v1050
      %1068 = vmatprep.subr.mxu0 0.0
      %1069 = vmatpush1.msra.mxu0 %v1051
      %1070 = vmatprep.subr.mxu0 0.0
      %1071 = vmatpush1.msra.mxu0 %v1052
      %1072 = vmatprep.subr.mxu0 0.0
      %1073 = vmatpush1.msra.mxu0 %v1053
      %1074 = vmatprep.subr.mxu0 0.0
      %1075 = vmatpush1.msra.mxu0 %v1054
      %1076 = vmatprep.subr.mxu0 0.0
      %1077 = vmatpush1.msra.mxu0 %v1055
      %1078 = vmatprep.subr.mxu0 0.0
      %1079 = vmatpush1.msra.mxu0 %v1056
      %1080 = vmatprep.subr.mxu0 0.0
      %1081 = vmatpush1.msra.mxu0 0.0
      %1082 = vmatprep.subr.mxu0 0.0
      %1083 = vmatpush1.msra.mxu0 0.0
      %1084 = vmatprep.subr.mxu0 0.0
      %1085 = vmatpush1.msra.mxu0 0.0
      %1086 = vmatprep.subr.mxu0 0.0
      %1087 = vmatpush1.msra.mxu0 0.0
      %1088 = vmatprep.subr.mxu0 0.0
      %1089 = vmatpush1.msra.mxu0 0.0
      %1090 = vmatprep.subr.mxu0 0.0
      %1091 = vmatpush1.msra.mxu0 0.0
      %1092 = vmatprep.subr.mxu0 0.0
      %1093 = vmatpush1.msra.mxu0 0.0
      %1094 = vmatprep.subr.mxu0 0.0
      %1095 = vmatpush1.msra.mxu0 0.0
      %1096 = vmatprep.subr.mxu0 0.0
      %1097 = vmatpush1.msra.mxu0 0.0
      %1098 = vmatprep.subr.mxu0 0.0
      %1099 = vmatpush1.msra.mxu0 0.0
      %1100 = vmatprep.subr.mxu0 0.0
      %1101 = vmatpush1.msra.mxu0 0.0
      %1102 = vmatprep.subr.mxu0 0.0
      %1103 = vmatpush1.msra.mxu0 0.0
      %1104 = vmatprep.subr.mxu0 0.0
      %1105 = vmatpush1.msra.mxu0 0.0
      %1106 = vmatprep.subr.mxu0 0.0
      %1107 = vmatpush1.msra.mxu0 0.0
      %1108 = vmatprep.subr.mxu0 0.0
      %1109 = vmatpush1.msra.mxu0 0.0
      %1110 = vmatprep.subr.mxu0 0.0
      %1111 = vmatpush1.msra.mxu0 0.0
      %1112 = vmatprep.subr.mxu0 0.0
      %1113 = vmatpush1.msra.mxu0 0.0
      %1114 = vmatprep.subr.mxu0 0.0
      %1115 = vmatpush1.msra.mxu0 0.0
      %1116 = vmatprep.subr.mxu0 0.0
      %1117 = vmatpush1.msra.mxu0 0.0
      %1118 = vmatprep.subr.mxu0 0.0
      %1119 = vmatpush1.msra.mxu0 0.0
      %1120 = vmatprep.subr.mxu0 0.0
      %1121 = vmatpush1.msra.mxu0 0.0
      %1122 = vmatprep.subr.mxu0 0.0
      %1123 = vmatpush1.msra.mxu0 0.0
      %1124 = vmatprep.mubr.f32.mxu0 0.0
      %1125 = vmatmul.mubr.f32.gmra.mrb[0].mxu0 %v1058
      %v1126 = vpop.f32.mrb[0].mxu0
      %v1127 = vadd.f32 0.0, %v1126
      %v1128 = vpop.f32.mrb[0].mxu0
      %1129 = vdwg.mxu0
      %v1130 = vadd.f32 %v1042, %v1127
      %v1131 = vld [vmem:[%s6] sm:$0x1]
      %v1133 = vlaneseq
      %v1134 = vshrl.u32 %v1133, 7
      %v1135 = vsub.s32 0, %v1134
      %v1136 = vrot.slane %v1131, %v1135
      %v1138 = vadd.f32 %v1130, %v1136
      %v1139 = vmin.f32 %v1138, 25.0
      %v1140 = vmul.f32 %v1139, 1.442695
      %v1141 = vpow.pop %v1140
      %v1142 = vadd.f32 %v1141, 2.0
      %v1143 = vmul.f32 %v1141, %v1142
      %v1144 = vmul.f32 %v1138, %v1143
      %v1145 = vadd.f32 %v1143, 2.0
      %v1146 = vrcp.pop %v1145
      %v1147 = vmul.f32 %v1144, %v1146
      %vm1148 = vcmask 523264
      %1149 = vst.msk [vmem:[%s276] sm:$0xff] %vm1148, %v1147
      %p1150 = scmp.lt.s32.totalorder %s18, 1
      %s1151 = scalar_select %p1150, %s18, 1
      %s1152 = smul.addr %s1151, 8
      %s1153 = scalar_lea.vmem %s7, %s1152
      // Predicated region
      $region49: #{down_forward.1} parent=47 // pred_check
        %p1154 = pneg %p188
      $region50: #{down_forward.1} parent=47 // pred_check_branch
        %1156 = sbr.rel (%p1154) target = $region52
      $region51: #{down_forward.1} parent=47 // pred_region
        _
      $region52: #{down_forward.1} parent=47 // pred_fallthru
        _
    $region48: #{down_forward.1} parent=5 // pred_fallthru
      _
    %p1157 = scmp.le.s32.totalorder 2, %s13
    // Predicated region
    $region53: #{down_forward.1} parent=5 // pred_check
      %p1158 = pneg %p1157
    $region54: #{down_forward.1} parent=5 // pred_check_branch
      %1160 = sbr.rel (%p1158) target = $region56
    $region55: #{down_forward.1} parent=5 // pred_region
      %s1161 = ssub.s32 %s13, 2
      // Predicated region
      $region57: #{down_forward.1} parent=55 // pred_check
        %p1162 = pneg %p194
      $region58: #{down_forward.1} parent=55 // pred_check_branch
        %1164 = sbr.rel (%p1162) target = $region60
      $region59: #{down_forward.1} parent=55 // pred_region
        %p1165 = scmp.lt.s32.totalorder %s19, 1
        %s1166 = scalar_select %p1165, %s19, 1
        %s1167 = smul.addr %s1166, 8
        %s1168 = scalar_lea.vmem %s7, %s1167
      $region60: #{down_forward.1} parent=55 // pred_fallthru
        _
    $region56: #{down_forward.1} parent=5 // pred_fallthru
      _
  $region6: #{down_forward.1} parent=0 // loop_footer
    %s17 = sadd.s32 1, %s13
  $region7: #{down_forward.1} parent=0 // loop_footer_branch
    %12 = sbr.rel target = $region3
  $region8: #{down_forward.1} parent=0 // loop_exit
    _

</llo_original>
